<compile_context>
chip_gen: v7x
topology: tpu7x:2x2x1
jax: 0.10.0
libtpu: 0.0.40
codegen_flags: <defaults>
</compile_context>

<pallas_src>
import functools

import jax
import jax.numpy as jnp
from jax.experimental import pallas as pl
from jax.experimental.pallas import tpu as pltpu


# ----------------------------------------------------------------------------
# Single fused kernel: input projection + bidirectional recurrence + MLP head
# ----------------------------------------------------------------------------
def _bilstm_fused_kernel(x_ref, wih_ref, b_ref, whh_ref,
                         w1_ref, b1_ref, w2_ref, b2_ref, out_ref,
                         *, L, B, H):
    """
    x_ref   : (L*B, E)  time-major flattened embeddings (row = t*B + b)
    wih_ref : (E, 8H)   [W_ih_fwd^T | W_ih_bwd^T]
    b_ref   : (1, 8H)   [b_ih_f + b_hh_f | b_ih_b + b_hh_b]
    whh_ref : (2H, 8H)  block-diag(W_hh_fwd^T, W_hh_bwd^T)
    w1_ref  : (2H, LS)  head hidden weight (pre-transposed), b1_ref (1, LS)
    w2_ref  : (LS, NL)  head output weight (pre-transposed), b2_ref (1, NL)
    out_ref : (B, NL)
    """
    # 1) Hoisted input projection for BOTH directions as one MXU matmul,
    #    bias folded in (no per-timestep x @ W_ih).
    gx = (jnp.dot(x_ref[...], wih_ref[...],
                  preferred_element_type=jnp.float32) + b_ref[...])   # (L*B, 8H)

    def cell(gates, c_prev):
        # PyTorch gate order: i, f, g, o (each H lanes wide).
        i = jax.nn.sigmoid(gates[:, 0 * H:1 * H])
        f = jax.nn.sigmoid(gates[:, 1 * H:2 * H])
        g = jnp.tanh(gates[:, 2 * H:3 * H])
        o = jax.nn.sigmoid(gates[:, 3 * H:4 * H])
        c = f * c_prev + i * g
        h = o * jnp.tanh(c)
        return h, c

    zeros = jnp.zeros((B, H), jnp.float32)
    h_f, c_f = zeros, zeros
    h_b, c_b = zeros, zeros

    # 2) Recurrence: only the h-dependent matmul remains per step.  The fwd
    #    direction consumes time t, the bwd direction consumes time L-1-t
    #    (reversed indexing instead of flipping arrays).  L is small and
    #    static, so the loop is fully unrolled and every slice is static.
    for t in range(L):
        hc = jnp.concatenate([h_f, h_b], axis=1)                       # (B, 2H)
        gh = jnp.dot(hc, whh_ref[...],
                     preferred_element_type=jnp.float32)               # (B, 8H)
        gx_f = gx[t * B:(t + 1) * B, :4 * H]                           # fwd @ t
        tb = L - 1 - t
        gx_b = gx[tb * B:(tb + 1) * B, 4 * H:]                         # bwd @ L-1-t
        h_f, c_f = cell(gx_f + gh[:, :4 * H], c_f)
        h_b, c_b = cell(gx_b + gh[:, 4 * H:], c_b)

    # 3) Fused classifier head: relu(cat @ W1^T + b1) @ W2^T + b2, where
    #    cat == [lstm_out[:, -1, :H], lstm_out[:, 0, H:]]  (fwd/bwd final h).
    cat = jnp.concatenate([h_f, h_b], axis=1)                          # (B, 2H)
    lin = jnp.dot(cat, w1_ref[...],
                  preferred_element_type=jnp.float32) + b1_ref[...]
    lin = jnp.maximum(lin, 0.0)
    out_ref[...] = (jnp.dot(lin, w2_ref[...],
                            preferred_element_type=jnp.float32) + b2_ref[...])


def _fused_bilstm_call(x_tm, wih, bias, whh, w1_t, b1, w2_t, b2, *, L, B, H):
    NL = w2_t.shape[1]
    vmem = pl.BlockSpec(memory_space=pltpu.MemorySpace.VMEM)
    return pl.pallas_call(
        functools.partial(_bilstm_fused_kernel, L=L, B=B, H=H),
        out_shape=jax.ShapeDtypeStruct((B, NL), jnp.float32),
        in_specs=[vmem] * 8,
        out_specs=vmem,
    )(x_tm, wih, bias, whh, w1_t, b1, w2_t, b2)


# ----------------------------------------------------------------------------
# Full forward (bilstm branch of lstm_classifier)
# ----------------------------------------------------------------------------
def lstm_classifier_forward(params, x_tokens, target_word, x_len, task_id_0):
    del target_word, x_len  # unused in the 'bilstm' branch (matches reference)
    B, L = x_tokens.shape
    H = params["w_hh_f"].shape[1]

    # Embedding lookup (glue: plain JAX gather).  Dropout: eval-mode identity.
    emb = params["embedding"][x_tokens]                        # (B, L, 300)
    x_tm = jnp.transpose(emb, (1, 0, 2)).reshape(L * B, -1)    # time-major flat

    # Pack weights for the fused kernel (cheap; fused into the jit).
    wih = jnp.concatenate([params["w_ih_f"].T, params["w_ih_b"].T], axis=1)
    bias = jnp.concatenate(
        [params["b_ih_f"] + params["b_hh_f"],
         params["b_ih_b"] + params["b_hh_b"]]).reshape(1, 8 * H)
    whh = jnp.zeros((2 * H, 8 * H), jnp.float32)
    whh = whh.at[:H, :4 * H].set(params["w_hh_f"].T)
    whh = whh.at[H:, 4 * H:].set(params["w_hh_b"].T)

    if task_id_0 == 0:
        w1, b1, w2, b2 = (params["W_lin_main"], params["b_lin_main"],
                          params["W_out_main"], params["b_out_main"])
    else:
        w1, b1, w2, b2 = (params["W_lin_aux"], params["b_lin_aux"],
                          params["W_out_aux"], params["b_out_aux"])

    return _fused_bilstm_call(
        x_tm, wih, bias, whh,
        w1.T, b1.reshape(1, -1), w2.T, b2.reshape(1, -1),
        L=L, B=B, H=H)


# ----------------------------------------------------------------------------
# Pure-JAX reference (for a correctness check in __main__)
# ----------------------------------------------------------------------------
def _reference_forward(params, x_tokens, task_id_0):
    emb = params["embedding"][x_tokens]
    x_seq = jnp.transpose(emb, (1, 0, 2))                      # (L, B, E)
    H = params["w_hh_f"].shape[1]
    B = x_seq.shape[1]

    def run_dir(seq, w_ih, w_hh, b_ih, b_hh):
        def step(carry, x_t):
            h, c = carry
            gates = x_t @ w_ih.T + b_ih + h @ w_hh.T + b_hh
            i = jax.nn.sigmoid(gates[:, :H])
            f = jax.nn.sigmoid(gates[:, H:2 * H])
            g = jnp.tanh(gates[:, 2 * H:3 * H])
            o = jax.nn.sigmoid(gates[:, 3 * H:])
            c = f * c + i * g
            h = o * jnp.tanh(c)
            return (h, c), None
        init = (jnp.zeros((B, H), jnp.float32), jnp.zeros((B, H), jnp.float32))
        (h, _), _ = jax.lax.scan(step, init, seq)
        return h

    h_f = run_dir(x_seq, params["w_ih_f"], params["w_hh_f"],
                  params["b_ih_f"], params["b_hh_f"])
    h_b = run_dir(x_seq[::-1], params["w_ih_b"], params["w_hh_b"],
                  params["b_ih_b"], params["b_hh_b"])
    cat = jnp.concatenate([h_f, h_b], axis=1)
    if task_id_0 == 0:
        w1, b1, w2, b2 = (params["W_lin_main"], params["b_lin_main"],
                          params["W_out_main"], params["b_out_main"])
    else:
        w1, b1, w2, b2 = (params["W_lin_aux"], params["b_lin_aux"],
                          params["W_out_aux"], params["b_out_aux"])
    lin = jnp.maximum(cat @ w1.T + b1, 0.0)
    return lin @ w2.T + b2


# ----------------------------------------------------------------------------
# Deterministic parameter init (shapes match the nn.Module __init__)
# ----------------------------------------------------------------------------
def init_params(key, num_vocab, hidden_size, linear_size, num_labels, num_tar):
    E = 300
    H = hidden_size
    keys = jax.random.split(key, 20)

    def u(k, shape, fan):
        bound = 1.0 / jnp.sqrt(jnp.float32(fan))
        return jax.random.uniform(k, shape, jnp.float32, -bound, bound)

    return {
        "embedding": jax.random.normal(keys[0], (num_vocab, E), jnp.float32),
        # forward direction LSTM params (PyTorch layout: (4H, in)); b_ih & b_hh
        # kept separate to match PyTorch's init distribution.
        "w_ih_f": u(keys[1], (4 * H, E), H),
        "w_hh_f": u(keys[2], (4 * H, H), H),
        "b_ih_f": u(keys[3], (4 * H,), H),
        "b_hh_f": u(keys[4], (4 * H,), H),
        # backward direction
        "w_ih_b": u(keys[5], (4 * H, E), H),
        "w_hh_b": u(keys[6], (4 * H, H), H),
        "b_ih_b": u(keys[7], (4 * H,), H),
        "b_hh_b": u(keys[8], (4 * H,), H),
        # heads
        "W_lin_main": u(keys[9], (linear_size, 2 * H), 2 * H),
        "b_lin_main": u(keys[10], (linear_size,), 2 * H),
        "W_out_main": u(keys[11], (num_labels, linear_size), linear_size),
        "b_out_main": u(keys[12], (num_labels,), linear_size),
        "W_lin_aux":  u(keys[13], (linear_size, 2 * H), 2 * H),
        "b_lin_aux":  u(keys[14], (linear_size,), 2 * H),
        "W_out_aux":  u(keys[15], (num_tar, linear_size), linear_size),
        "b_out_aux":  u(keys[16], (num_tar,), linear_size),
    }


if __name__ == "__main__":
    # Small config consistent with the module's forward.
    num_vocab, hidden_size, linear_size = 50, 32, 64
    num_labels, num_tar = 3, 5
    B, L = 2, 8

    key = jax.random.PRNGKey(0)
    k_params, k_x, k_t = jax.random.split(key, 3)

    params = init_params(k_params, num_vocab, hidden_size, linear_size,
                         num_labels, num_tar)

    x = jax.random.randint(k_x, (B, L), 0, num_vocab, dtype=jnp.int32)
    target_word = jax.random.randint(k_t, (B, 3), 0, num_vocab, dtype=jnp.int32)
    x_len = jnp.full((B,), L, dtype=jnp.int32)
    task_id_0 = 0  # main task branch

    fwd = jax.jit(functools.partial(lstm_classifier_forward, task_id_0=task_id_0))
    out = jax.block_until_ready(fwd(params, x, target_word, x_len))

    assert out.shape == (B, num_labels), out.shape
    assert out.dtype == jnp.float32

    # Validate against a pure-JAX reference of the same math.
    ref = jax.block_until_ready(_reference_forward(params, x, task_id_0))
    max_err = float(jnp.max(jnp.abs(out - ref)))
    assert max_err < 1e-3, f"mismatch vs pure-JAX reference: max_abs_err={max_err}"

    print("KERNEL_OK")
</pallas_src>

<mosaic_0001>
module attributes {stable_mosaic.version = 11 : i64} {
  func.func @_bilstm_fused_kernel(%arg0: memref<16x300xf32, #tpu.memory_space<vmem>>, %arg1: memref<300x256xf32, #tpu.memory_space<vmem>>, %arg2: memref<1x256xf32, #tpu.memory_space<vmem>>, %arg3: memref<64x256xf32, #tpu.memory_space<vmem>>, %arg4: memref<64x64xf32, #tpu.memory_space<vmem>>, %arg5: memref<1x64xf32, #tpu.memory_space<vmem>>, %arg6: memref<64x3xf32, #tpu.memory_space<vmem>>, %arg7: memref<1x3xf32, #tpu.memory_space<vmem>>, %arg8: memref<2x3xf32, #tpu.memory_space<vmem>>) attributes {dimension_semantics = [], scalar_prefetch = 0 : i64, scratch_operands = 0 : i64, tpu.core_type = #tpu.core_type<tc>} {
    %c0 = arith.constant 0 : index
    %c0_0 = arith.constant 0 : index
    %0 = vector.load %arg0[%c0, %c0_0] : memref<16x300xf32, #tpu.memory_space<vmem>>, vector<16x300xf32>
    %c0_1 = arith.constant 0 : index
    %c0_2 = arith.constant 0 : index
    %1 = vector.load %arg1[%c0_1, %c0_2] : memref<300x256xf32, #tpu.memory_space<vmem>>, vector<300x256xf32>
    %cst = arith.constant dense<0.000000e+00> : vector<16x256xf32>
    %2 = tpu.matmul %0, %1, %cst {dimension_numbers = #tpu.dot_dimension_numbers<[1], [0], [0], [1], [0, 0, 1, 1], [], []>} : vector<16x300xf32>, vector<300x256xf32>, vector<16x256xf32> -> vector<16x256xf32>
    %c0_3 = arith.constant 0 : index
    %c0_4 = arith.constant 0 : index
    %3 = vector.load %arg2[%c0_3, %c0_4] : memref<1x256xf32, #tpu.memory_space<vmem>>, vector<1x256xf32>
    %4 = vector.broadcast %3 : vector<1x256xf32> to vector<16x256xf32>
    %5 = arith.addf %2, %4 : vector<16x256xf32>
    %cst_5 = arith.constant 0.000000e+00 : f32
    %6 = vector.broadcast %cst_5 : f32 to vector<2x32xf32>
    %7 = tpu.concatenate %6, %6 in 1 : vector<2x32xf32>, vector<2x32xf32> -> vector<2x64xf32>
    %c0_6 = arith.constant 0 : index
    %c0_7 = arith.constant 0 : index
    %8 = vector.load %arg3[%c0_6, %c0_7] : memref<64x256xf32, #tpu.memory_space<vmem>>, vector<64x256xf32>
    %cst_8 = arith.constant dense<0.000000e+00> : vector<2x256xf32>
    %9 = tpu.matmul %7, %8, %cst_8 {dimension_numbers = #tpu.dot_dimension_numbers<[1], [0], [0], [1], [0, 0, 1, 1], [], []>} : vector<2x64xf32>, vector<64x256xf32>, vector<2x256xf32> -> vector<2x256xf32>
    %10 = vector.extract_strided_slice %5 {offsets = [0, 0], sizes = [2, 128], strides = [1, 1]} : vector<16x256xf32> to vector<2x128xf32>
    %11 = vector.extract_strided_slice %5 {offsets = [14, 128], sizes = [2, 128], strides = [1, 1]} : vector<16x256xf32> to vector<2x128xf32>
    %12 = vector.extract_strided_slice %9 {offsets = [0, 0], sizes = [2, 128], strides = [1, 1]} : vector<2x256xf32> to vector<2x128xf32>
    %13 = arith.addf %10, %12 : vector<2x128xf32>
    %14 = vector.extract_strided_slice %13 {offsets = [0, 0], sizes = [2, 32], strides = [1, 1]} : vector<2x128xf32> to vector<2x32xf32>
    %15 = arith.negf %14 : vector<2x32xf32>
    %16 = math.exp %15 : vector<2x32xf32>
    %cst_9 = arith.constant 1.000000e+00 : f32
    %17 = vector.broadcast %cst_9 : f32 to vector<2x32xf32>
    %18 = arith.addf %17, %16 : vector<2x32xf32>
    %19 = arith.divf %17, %18 : vector<2x32xf32>
    %20 = vector.extract_strided_slice %13 {offsets = [0, 32], sizes = [2, 32], strides = [1, 1]} : vector<2x128xf32> to vector<2x32xf32>
    %21 = arith.negf %20 : vector<2x32xf32>
    %22 = math.exp %21 : vector<2x32xf32>
    %cst_10 = arith.constant 1.000000e+00 : f32
    %23 = vector.broadcast %cst_10 : f32 to vector<2x32xf32>
    %24 = arith.addf %23, %22 : vector<2x32xf32>
    %25 = arith.divf %23, %24 : vector<2x32xf32>
    %26 = vector.extract_strided_slice %13 {offsets = [0, 64], sizes = [2, 32], strides = [1, 1]} : vector<2x128xf32> to vector<2x32xf32>
    %27 = math.tanh %26 : vector<2x32xf32>
    %28 = vector.extract_strided_slice %13 {offsets = [0, 96], sizes = [2, 32], strides = [1, 1]} : vector<2x128xf32> to vector<2x32xf32>
    %29 = arith.negf %28 : vector<2x32xf32>
    %30 = math.exp %29 : vector<2x32xf32>
    %cst_11 = arith.constant 1.000000e+00 : f32
    %31 = vector.broadcast %cst_11 : f32 to vector<2x32xf32>
    %32 = arith.addf %31, %30 : vector<2x32xf32>
    %33 = arith.divf %31, %32 : vector<2x32xf32>
    %34 = arith.mulf %25, %6 : vector<2x32xf32>
    %35 = arith.mulf %19, %27 : vector<2x32xf32>
    %36 = arith.addf %34, %35 : vector<2x32xf32>
    %37 = math.tanh %36 : vector<2x32xf32>
    %38 = arith.mulf %33, %37 : vector<2x32xf32>
    %39 = vector.extract_strided_slice %9 {offsets = [0, 128], sizes = [2, 128], strides = [1, 1]} : vector<2x256xf32> to vector<2x128xf32>
    %40 = arith.addf %11, %39 : vector<2x128xf32>
    %41 = vector.extract_strided_slice %40 {offsets = [0, 0], sizes = [2, 32], strides = [1, 1]} : vector<2x128xf32> to vector<2x32xf32>
    %42 = arith.negf %41 : vector<2x32xf32>
    %43 = math.exp %42 : vector<2x32xf32>
    %cst_12 = arith.constant 1.000000e+00 : f32
    %44 = vector.broadcast %cst_12 : f32 to vector<2x32xf32>
    %45 = arith.addf %44, %43 : vector<2x32xf32>
    %46 = arith.divf %44, %45 : vector<2x32xf32>
    %47 = vector.extract_strided_slice %40 {offsets = [0, 32], sizes = [2, 32], strides = [1, 1]} : vector<2x128xf32> to vector<2x32xf32>
    %48 = arith.negf %47 : vector<2x32xf32>
    %49 = math.exp %48 : vector<2x32xf32>
    %cst_13 = arith.constant 1.000000e+00 : f32
    %50 = vector.broadcast %cst_13 : f32 to vector<2x32xf32>
    %51 = arith.addf %50, %49 : vector<2x32xf32>
    %52 = arith.divf %50, %51 : vector<2x32xf32>
    %53 = vector.extract_strided_slice %40 {offsets = [0, 64], sizes = [2, 32], strides = [1, 1]} : vector<2x128xf32> to vector<2x32xf32>
    %54 = math.tanh %53 : vector<2x32xf32>
    %55 = vector.extract_strided_slice %40 {offsets = [0, 96], sizes = [2, 32], strides = [1, 1]} : vector<2x128xf32> to vector<2x32xf32>
    %56 = arith.negf %55 : vector<2x32xf32>
    %57 = math.exp %56 : vector<2x32xf32>
    %cst_14 = arith.constant 1.000000e+00 : f32
    %58 = vector.broadcast %cst_14 : f32 to vector<2x32xf32>
    %59 = arith.addf %58, %57 : vector<2x32xf32>
    %60 = arith.divf %58, %59 : vector<2x32xf32>
    %61 = arith.mulf %52, %6 : vector<2x32xf32>
    %62 = arith.mulf %46, %54 : vector<2x32xf32>
    %63 = arith.addf %61, %62 : vector<2x32xf32>
    %64 = math.tanh %63 : vector<2x32xf32>
    %65 = arith.mulf %60, %64 : vector<2x32xf32>
    %66 = tpu.concatenate %38, %65 in 1 : vector<2x32xf32>, vector<2x32xf32> -> vector<2x64xf32>
    %c0_15 = arith.constant 0 : index
    %c0_16 = arith.constant 0 : index
    %67 = vector.load %arg3[%c0_15, %c0_16] : memref<64x256xf32, #tpu.memory_space<vmem>>, vector<64x256xf32>
    %cst_17 = arith.constant dense<0.000000e+00> : vector<2x256xf32>
    %68 = tpu.matmul %66, %67, %cst_17 {dimension_numbers = #tpu.dot_dimension_numbers<[1], [0], [0], [1], [0, 0, 1, 1], [], []>} : vector<2x64xf32>, vector<64x256xf32>, vector<2x256xf32> -> vector<2x256xf32>
    %69 = vector.extract_strided_slice %5 {offsets = [2, 0], sizes = [2, 128], strides = [1, 1]} : vector<16x256xf32> to vector<2x128xf32>
    %70 = vector.extract_strided_slice %5 {offsets = [12, 128], sizes = [2, 128], strides = [1, 1]} : vector<16x256xf32> to vector<2x128xf32>
    %71 = vector.extract_strided_slice %68 {offsets = [0, 0], sizes = [2, 128], strides = [1, 1]} : vector<2x256xf32> to vector<2x128xf32>
    %72 = arith.addf %69, %71 : vector<2x128xf32>
    %73 = vector.extract_strided_slice %72 {offsets = [0, 0], sizes = [2, 32], strides = [1, 1]} : vector<2x128xf32> to vector<2x32xf32>
    %74 = arith.negf %73 : vector<2x32xf32>
    %75 = math.exp %74 : vector<2x32xf32>
    %cst_18 = arith.constant 1.000000e+00 : f32
    %76 = vector.broadcast %cst_18 : f32 to vector<2x32xf32>
    %77 = arith.addf %76, %75 : vector<2x32xf32>
    %78 = arith.divf %76, %77 : vector<2x32xf32>
    %79 = vector.extract_strided_slice %72 {offsets = [0, 32], sizes = [2, 32], strides = [1, 1]} : vector<2x128xf32> to vector<2x32xf32>
    %80 = arith.negf %79 : vector<2x32xf32>
    %81 = math.exp %80 : vector<2x32xf32>
    %cst_19 = arith.constant 1.000000e+00 : f32
    %82 = vector.broadcast %cst_19 : f32 to vector<2x32xf32>
    %83 = arith.addf %82, %81 : vector<2x32xf32>
    %84 = arith.divf %82, %83 : vector<2x32xf32>
    %85 = vector.extract_strided_slice %72 {offsets = [0, 64], sizes = [2, 32], strides = [1, 1]} : vector<2x128xf32> to vector<2x32xf32>
    %86 = math.tanh %85 : vector<2x32xf32>
    %87 = vector.extract_strided_slice %72 {offsets = [0, 96], sizes = [2, 32], strides = [1, 1]} : vector<2x128xf32> to vector<2x32xf32>
    %88 = arith.negf %87 : vector<2x32xf32>
    %89 = math.exp %88 : vector<2x32xf32>
    %cst_20 = arith.constant 1.000000e+00 : f32
    %90 = vector.broadcast %cst_20 : f32 to vector<2x32xf32>
    %91 = arith.addf %90, %89 : vector<2x32xf32>
    %92 = arith.divf %90, %91 : vector<2x32xf32>
    %93 = arith.mulf %84, %36 : vector<2x32xf32>
    %94 = arith.mulf %78, %86 : vector<2x32xf32>
    %95 = arith.addf %93, %94 : vector<2x32xf32>
    %96 = math.tanh %95 : vector<2x32xf32>
    %97 = arith.mulf %92, %96 : vector<2x32xf32>
    %98 = vector.extract_strided_slice %68 {offsets = [0, 128], sizes = [2, 128], strides = [1, 1]} : vector<2x256xf32> to vector<2x128xf32>
    %99 = arith.addf %70, %98 : vector<2x128xf32>
    %100 = vector.extract_strided_slice %99 {offsets = [0, 0], sizes = [2, 32], strides = [1, 1]} : vector<2x128xf32> to vector<2x32xf32>
    %101 = arith.negf %100 : vector<2x32xf32>
    %102 = math.exp %101 : vector<2x32xf32>
    %cst_21 = arith.constant 1.000000e+00 : f32
    %103 = vector.broadcast %cst_21 : f32 to vector<2x32xf32>
    %104 = arith.addf %103, %102 : vector<2x32xf32>
    %105 = arith.divf %103, %104 : vector<2x32xf32>
    %106 = vector.extract_strided_slice %99 {offsets = [0, 32], sizes = [2, 32], strides = [1, 1]} : vector<2x128xf32> to vector<2x32xf32>
    %107 = arith.negf %106 : vector<2x32xf32>
    %108 = math.exp %107 : vector<2x32xf32>
    %cst_22 = arith.constant 1.000000e+00 : f32
    %109 = vector.broadcast %cst_22 : f32 to vector<2x32xf32>
    %110 = arith.addf %109, %108 : vector<2x32xf32>
    %111 = arith.divf %109, %110 : vector<2x32xf32>
    %112 = vector.extract_strided_slice %99 {offsets = [0, 64], sizes = [2, 32], strides = [1, 1]} : vector<2x128xf32> to vector<2x32xf32>
    %113 = math.tanh %112 : vector<2x32xf32>
    %114 = vector.extract_strided_slice %99 {offsets = [0, 96], sizes = [2, 32], strides = [1, 1]} : vector<2x128xf32> to vector<2x32xf32>
    %115 = arith.negf %114 : vector<2x32xf32>
    %116 = math.exp %115 : vector<2x32xf32>
    %cst_23 = arith.constant 1.000000e+00 : f32
    %117 = vector.broadcast %cst_23 : f32 to vector<2x32xf32>
    %118 = arith.addf %117, %116 : vector<2x32xf32>
    %119 = arith.divf %117, %118 : vector<2x32xf32>
    %120 = arith.mulf %111, %63 : vector<2x32xf32>
    %121 = arith.mulf %105, %113 : vector<2x32xf32>
    %122 = arith.addf %120, %121 : vector<2x32xf32>
    %123 = math.tanh %122 : vector<2x32xf32>
    %124 = arith.mulf %119, %123 : vector<2x32xf32>
    %125 = tpu.concatenate %97, %124 in 1 : vector<2x32xf32>, vector<2x32xf32> -> vector<2x64xf32>
    %c0_24 = arith.constant 0 : index
    %c0_25 = arith.constant 0 : index
    %126 = vector.load %arg3[%c0_24, %c0_25] : memref<64x256xf32, #tpu.memory_space<vmem>>, vector<64x256xf32>
    %cst_26 = arith.constant dense<0.000000e+00> : vector<2x256xf32>
    %127 = tpu.matmul %125, %126, %cst_26 {dimension_numbers = #tpu.dot_dimension_numbers<[1], [0], [0], [1], [0, 0, 1, 1], [], []>} : vector<2x64xf32>, vector<64x256xf32>, vector<2x256xf32> -> vector<2x256xf32>
    %128 = vector.extract_strided_slice %5 {offsets = [4, 0], sizes = [2, 128], strides = [1, 1]} : vector<16x256xf32> to vector<2x128xf32>
    %129 = vector.extract_strided_slice %5 {offsets = [10, 128], sizes = [2, 128], strides = [1, 1]} : vector<16x256xf32> to vector<2x128xf32>
    %130 = vector.extract_strided_slice %127 {offsets = [0, 0], sizes = [2, 128], strides = [1, 1]} : vector<2x256xf32> to vector<2x128xf32>
    %131 = arith.addf %128, %130 : vector<2x128xf32>
    %132 = vector.extract_strided_slice %131 {offsets = [0, 0], sizes = [2, 32], strides = [1, 1]} : vector<2x128xf32> to vector<2x32xf32>
    %133 = arith.negf %132 : vector<2x32xf32>
    %134 = math.exp %133 : vector<2x32xf32>
    %cst_27 = arith.constant 1.000000e+00 : f32
    %135 = vector.broadcast %cst_27 : f32 to vector<2x32xf32>
    %136 = arith.addf %135, %134 : vector<2x32xf32>
    %137 = arith.divf %135, %136 : vector<2x32xf32>
    %138 = vector.extract_strided_slice %131 {offsets = [0, 32], sizes = [2, 32], strides = [1, 1]} : vector<2x128xf32> to vector<2x32xf32>
    %139 = arith.negf %138 : vector<2x32xf32>
    %140 = math.exp %139 : vector<2x32xf32>
    %cst_28 = arith.constant 1.000000e+00 : f32
    %141 = vector.broadcast %cst_28 : f32 to vector<2x32xf32>
    %142 = arith.addf %141, %140 : vector<2x32xf32>
    %143 = arith.divf %141, %142 : vector<2x32xf32>
    %144 = vector.extract_strided_slice %131 {offsets = [0, 64], sizes = [2, 32], strides = [1, 1]} : vector<2x128xf32> to vector<2x32xf32>
    %145 = math.tanh %144 : vector<2x32xf32>
    %146 = vector.extract_strided_slice %131 {offsets = [0, 96], sizes = [2, 32], strides = [1, 1]} : vector<2x128xf32> to vector<2x32xf32>
    %147 = arith.negf %146 : vector<2x32xf32>
    %148 = math.exp %147 : vector<2x32xf32>
    %cst_29 = arith.constant 1.000000e+00 : f32
    %149 = vector.broadcast %cst_29 : f32 to vector<2x32xf32>
    %150 = arith.addf %149, %148 : vector<2x32xf32>
    %151 = arith.divf %149, %150 : vector<2x32xf32>
    %152 = arith.mulf %143, %95 : vector<2x32xf32>
    %153 = arith.mulf %137, %145 : vector<2x32xf32>
    %154 = arith.addf %152, %153 : vector<2x32xf32>
    %155 = math.tanh %154 : vector<2x32xf32>
    %156 = arith.mulf %151, %155 : vector<2x32xf32>
    %157 = vector.extract_strided_slice %127 {offsets = [0, 128], sizes = [2, 128], strides = [1, 1]} : vector<2x256xf32> to vector<2x128xf32>
    %158 = arith.addf %129, %157 : vector<2x128xf32>
    %159 = vector.extract_strided_slice %158 {offsets = [0, 0], sizes = [2, 32], strides = [1, 1]} : vector<2x128xf32> to vector<2x32xf32>
    %160 = arith.negf %159 : vector<2x32xf32>
    %161 = math.exp %160 : vector<2x32xf32>
    %cst_30 = arith.constant 1.000000e+00 : f32
    %162 = vector.broadcast %cst_30 : f32 to vector<2x32xf32>
    %163 = arith.addf %162, %161 : vector<2x32xf32>
    %164 = arith.divf %162, %163 : vector<2x32xf32>
    %165 = vector.extract_strided_slice %158 {offsets = [0, 32], sizes = [2, 32], strides = [1, 1]} : vector<2x128xf32> to vector<2x32xf32>
    %166 = arith.negf %165 : vector<2x32xf32>
    %167 = math.exp %166 : vector<2x32xf32>
    %cst_31 = arith.constant 1.000000e+00 : f32
    %168 = vector.broadcast %cst_31 : f32 to vector<2x32xf32>
    %169 = arith.addf %168, %167 : vector<2x32xf32>
    %170 = arith.divf %168, %169 : vector<2x32xf32>
    %171 = vector.extract_strided_slice %158 {offsets = [0, 64], sizes = [2, 32], strides = [1, 1]} : vector<2x128xf32> to vector<2x32xf32>
    %172 = math.tanh %171 : vector<2x32xf32>
    %173 = vector.extract_strided_slice %158 {offsets = [0, 96], sizes = [2, 32], strides = [1, 1]} : vector<2x128xf32> to vector<2x32xf32>
    %174 = arith.negf %173 : vector<2x32xf32>
    %175 = math.exp %174 : vector<2x32xf32>
    %cst_32 = arith.constant 1.000000e+00 : f32
    %176 = vector.broadcast %cst_32 : f32 to vector<2x32xf32>
    %177 = arith.addf %176, %175 : vector<2x32xf32>
    %178 = arith.divf %176, %177 : vector<2x32xf32>
    %179 = arith.mulf %170, %122 : vector<2x32xf32>
    %180 = arith.mulf %164, %172 : vector<2x32xf32>
    %181 = arith.addf %179, %180 : vector<2x32xf32>
    %182 = math.tanh %181 : vector<2x32xf32>
    %183 = arith.mulf %178, %182 : vector<2x32xf32>
    %184 = tpu.concatenate %156, %183 in 1 : vector<2x32xf32>, vector<2x32xf32> -> vector<2x64xf32>
    %c0_33 = arith.constant 0 : index
    %c0_34 = arith.constant 0 : index
    %185 = vector.load %arg3[%c0_33, %c0_34] : memref<64x256xf32, #tpu.memory_space<vmem>>, vector<64x256xf32>
    %cst_35 = arith.constant dense<0.000000e+00> : vector<2x256xf32>
    %186 = tpu.matmul %184, %185, %cst_35 {dimension_numbers = #tpu.dot_dimension_numbers<[1], [0], [0], [1], [0, 0, 1, 1], [], []>} : vector<2x64xf32>, vector<64x256xf32>, vector<2x256xf32> -> vector<2x256xf32>
    %187 = vector.extract_strided_slice %5 {offsets = [6, 0], sizes = [2, 128], strides = [1, 1]} : vector<16x256xf32> to vector<2x128xf32>
    %188 = vector.extract_strided_slice %5 {offsets = [8, 128], sizes = [2, 128], strides = [1, 1]} : vector<16x256xf32> to vector<2x128xf32>
    %189 = vector.extract_strided_slice %186 {offsets = [0, 0], sizes = [2, 128], strides = [1, 1]} : vector<2x256xf32> to vector<2x128xf32>
    %190 = arith.addf %187, %189 : vector<2x128xf32>
    %191 = vector.extract_strided_slice %190 {offsets = [0, 0], sizes = [2, 32], strides = [1, 1]} : vector<2x128xf32> to vector<2x32xf32>
    %192 = arith.negf %191 : vector<2x32xf32>
    %193 = math.exp %192 : vector<2x32xf32>
    %cst_36 = arith.constant 1.000000e+00 : f32
    %194 = vector.broadcast %cst_36 : f32 to vector<2x32xf32>
    %195 = arith.addf %194, %193 : vector<2x32xf32>
    %196 = arith.divf %194, %195 : vector<2x32xf32>
    %197 = vector.extract_strided_slice %190 {offsets = [0, 32], sizes = [2, 32], strides = [1, 1]} : vector<2x128xf32> to vector<2x32xf32>
    %198 = arith.negf %197 : vector<2x32xf32>
    %199 = math.exp %198 : vector<2x32xf32>
    %cst_37 = arith.constant 1.000000e+00 : f32
    %200 = vector.broadcast %cst_37 : f32 to vector<2x32xf32>
    %201 = arith.addf %200, %199 : vector<2x32xf32>
    %202 = arith.divf %200, %201 : vector<2x32xf32>
    %203 = vector.extract_strided_slice %190 {offsets = [0, 64], sizes = [2, 32], strides = [1, 1]} : vector<2x128xf32> to vector<2x32xf32>
    %204 = math.tanh %203 : vector<2x32xf32>
    %205 = vector.extract_strided_slice %190 {offsets = [0, 96], sizes = [2, 32], strides = [1, 1]} : vector<2x128xf32> to vector<2x32xf32>
    %206 = arith.negf %205 : vector<2x32xf32>
    %207 = math.exp %206 : vector<2x32xf32>
    %cst_38 = arith.constant 1.000000e+00 : f32
    %208 = vector.broadcast %cst_38 : f32 to vector<2x32xf32>
    %209 = arith.addf %208, %207 : vector<2x32xf32>
    %210 = arith.divf %208, %209 : vector<2x32xf32>
    %211 = arith.mulf %202, %154 : vector<2x32xf32>
    %212 = arith.mulf %196, %204 : vector<2x32xf32>
    %213 = arith.addf %211, %212 : vector<2x32xf32>
    %214 = math.tanh %213 : vector<2x32xf32>
    %215 = arith.mulf %210, %214 : vector<2x32xf32>
    %216 = vector.extract_strided_slice %186 {offsets = [0, 128], sizes = [2, 128], strides = [1, 1]} : vector<2x256xf32> to vector<2x128xf32>
    %217 = arith.addf %188, %216 : vector<2x128xf32>
    %218 = vector.extract_strided_slice %217 {offsets = [0, 0], sizes = [2, 32], strides = [1, 1]} : vector<2x128xf32> to vector<2x32xf32>
    %219 = arith.negf %218 : vector<2x32xf32>
    %220 = math.exp %219 : vector<2x32xf32>
    %cst_39 = arith.constant 1.000000e+00 : f32
    %221 = vector.broadcast %cst_39 : f32 to vector<2x32xf32>
    %222 = arith.addf %221, %220 : vector<2x32xf32>
    %223 = arith.divf %221, %222 : vector<2x32xf32>
    %224 = vector.extract_strided_slice %217 {offsets = [0, 32], sizes = [2, 32], strides = [1, 1]} : vector<2x128xf32> to vector<2x32xf32>
    %225 = arith.negf %224 : vector<2x32xf32>
    %226 = math.exp %225 : vector<2x32xf32>
    %cst_40 = arith.constant 1.000000e+00 : f32
    %227 = vector.broadcast %cst_40 : f32 to vector<2x32xf32>
    %228 = arith.addf %227, %226 : vector<2x32xf32>
    %229 = arith.divf %227, %228 : vector<2x32xf32>
    %230 = vector.extract_strided_slice %217 {offsets = [0, 64], sizes = [2, 32], strides = [1, 1]} : vector<2x128xf32> to vector<2x32xf32>
    %231 = math.tanh %230 : vector<2x32xf32>
    %232 = vector.extract_strided_slice %217 {offsets = [0, 96], sizes = [2, 32], strides = [1, 1]} : vector<2x128xf32> to vector<2x32xf32>
    %233 = arith.negf %232 : vector<2x32xf32>
    %234 = math.exp %233 : vector<2x32xf32>
    %cst_41 = arith.constant 1.000000e+00 : f32
    %235 = vector.broadcast %cst_41 : f32 to vector<2x32xf32>
    %236 = arith.addf %235, %234 : vector<2x32xf32>
    %237 = arith.divf %235, %236 : vector<2x32xf32>
    %238 = arith.mulf %229, %181 : vector<2x32xf32>
    %239 = arith.mulf %223, %231 : vector<2x32xf32>
    %240 = arith.addf %238, %239 : vector<2x32xf32>
    %241 = math.tanh %240 : vector<2x32xf32>
    %242 = arith.mulf %237, %241 : vector<2x32xf32>
    %243 = tpu.concatenate %215, %242 in 1 : vector<2x32xf32>, vector<2x32xf32> -> vector<2x64xf32>
    %c0_42 = arith.constant 0 : index
    %c0_43 = arith.constant 0 : index
    %244 = vector.load %arg3[%c0_42, %c0_43] : memref<64x256xf32, #tpu.memory_space<vmem>>, vector<64x256xf32>
    %cst_44 = arith.constant dense<0.000000e+00> : vector<2x256xf32>
    %245 = tpu.matmul %243, %244, %cst_44 {dimension_numbers = #tpu.dot_dimension_numbers<[1], [0], [0], [1], [0, 0, 1, 1], [], []>} : vector<2x64xf32>, vector<64x256xf32>, vector<2x256xf32> -> vector<2x256xf32>
    %246 = vector.extract_strided_slice %5 {offsets = [8, 0], sizes = [2, 128], strides = [1, 1]} : vector<16x256xf32> to vector<2x128xf32>
    %247 = vector.extract_strided_slice %5 {offsets = [6, 128], sizes = [2, 128], strides = [1, 1]} : vector<16x256xf32> to vector<2x128xf32>
    %248 = vector.extract_strided_slice %245 {offsets = [0, 0], sizes = [2, 128], strides = [1, 1]} : vector<2x256xf32> to vector<2x128xf32>
    %249 = arith.addf %246, %248 : vector<2x128xf32>
    %250 = vector.extract_strided_slice %249 {offsets = [0, 0], sizes = [2, 32], strides = [1, 1]} : vector<2x128xf32> to vector<2x32xf32>
    %251 = arith.negf %250 : vector<2x32xf32>
    %252 = math.exp %251 : vector<2x32xf32>
    %cst_45 = arith.constant 1.000000e+00 : f32
    %253 = vector.broadcast %cst_45 : f32 to vector<2x32xf32>
    %254 = arith.addf %253, %252 : vector<2x32xf32>
    %255 = arith.divf %253, %254 : vector<2x32xf32>
    %256 = vector.extract_strided_slice %249 {offsets = [0, 32], sizes = [2, 32], strides = [1, 1]} : vector<2x128xf32> to vector<2x32xf32>
    %257 = arith.negf %256 : vector<2x32xf32>
    %258 = math.exp %257 : vector<2x32xf32>
    %cst_46 = arith.constant 1.000000e+00 : f32
    %259 = vector.broadcast %cst_46 : f32 to vector<2x32xf32>
    %260 = arith.addf %259, %258 : vector<2x32xf32>
    %261 = arith.divf %259, %260 : vector<2x32xf32>
    %262 = vector.extract_strided_slice %249 {offsets = [0, 64], sizes = [2, 32], strides = [1, 1]} : vector<2x128xf32> to vector<2x32xf32>
    %263 = math.tanh %262 : vector<2x32xf32>
    %264 = vector.extract_strided_slice %249 {offsets = [0, 96], sizes = [2, 32], strides = [1, 1]} : vector<2x128xf32> to vector<2x32xf32>
    %265 = arith.negf %264 : vector<2x32xf32>
    %266 = math.exp %265 : vector<2x32xf32>
    %cst_47 = arith.constant 1.000000e+00 : f32
    %267 = vector.broadcast %cst_47 : f32 to vector<2x32xf32>
    %268 = arith.addf %267, %266 : vector<2x32xf32>
    %269 = arith.divf %267, %268 : vector<2x32xf32>
    %270 = arith.mulf %261, %213 : vector<2x32xf32>
    %271 = arith.mulf %255, %263 : vector<2x32xf32>
    %272 = arith.addf %270, %271 : vector<2x32xf32>
    %273 = math.tanh %272 : vector<2x32xf32>
    %274 = arith.mulf %269, %273 : vector<2x32xf32>
    %275 = vector.extract_strided_slice %245 {offsets = [0, 128], sizes = [2, 128], strides = [1, 1]} : vector<2x256xf32> to vector<2x128xf32>
    %276 = arith.addf %247, %275 : vector<2x128xf32>
    %277 = vector.extract_strided_slice %276 {offsets = [0, 0], sizes = [2, 32], strides = [1, 1]} : vector<2x128xf32> to vector<2x32xf32>
    %278 = arith.negf %277 : vector<2x32xf32>
    %279 = math.exp %278 : vector<2x32xf32>
    %cst_48 = arith.constant 1.000000e+00 : f32
    %280 = vector.broadcast %cst_48 : f32 to vector<2x32xf32>
    %281 = arith.addf %280, %279 : vector<2x32xf32>
    %282 = arith.divf %280, %281 : vector<2x32xf32>
    %283 = vector.extract_strided_slice %276 {offsets = [0, 32], sizes = [2, 32], strides = [1, 1]} : vector<2x128xf32> to vector<2x32xf32>
    %284 = arith.negf %283 : vector<2x32xf32>
    %285 = math.exp %284 : vector<2x32xf32>
    %cst_49 = arith.constant 1.000000e+00 : f32
    %286 = vector.broadcast %cst_49 : f32 to vector<2x32xf32>
    %287 = arith.addf %286, %285 : vector<2x32xf32>
    %288 = arith.divf %286, %287 : vector<2x32xf32>
    %289 = vector.extract_strided_slice %276 {offsets = [0, 64], sizes = [2, 32], strides = [1, 1]} : vector<2x128xf32> to vector<2x32xf32>
    %290 = math.tanh %289 : vector<2x32xf32>
    %291 = vector.extract_strided_slice %276 {offsets = [0, 96], sizes = [2, 32], strides = [1, 1]} : vector<2x128xf32> to vector<2x32xf32>
    %292 = arith.negf %291 : vector<2x32xf32>
    %293 = math.exp %292 : vector<2x32xf32>
    %cst_50 = arith.constant 1.000000e+00 : f32
    %294 = vector.broadcast %cst_50 : f32 to vector<2x32xf32>
    %295 = arith.addf %294, %293 : vector<2x32xf32>
    %296 = arith.divf %294, %295 : vector<2x32xf32>
    %297 = arith.mulf %288, %240 : vector<2x32xf32>
    %298 = arith.mulf %282, %290 : vector<2x32xf32>
    %299 = arith.addf %297, %298 : vector<2x32xf32>
    %300 = math.tanh %299 : vector<2x32xf32>
    %301 = arith.mulf %296, %300 : vector<2x32xf32>
    %302 = tpu.concatenate %274, %301 in 1 : vector<2x32xf32>, vector<2x32xf32> -> vector<2x64xf32>
    %c0_51 = arith.constant 0 : index
    %c0_52 = arith.constant 0 : index
    %303 = vector.load %arg3[%c0_51, %c0_52] : memref<64x256xf32, #tpu.memory_space<vmem>>, vector<64x256xf32>
    %cst_53 = arith.constant dense<0.000000e+00> : vector<2x256xf32>
    %304 = tpu.matmul %302, %303, %cst_53 {dimension_numbers = #tpu.dot_dimension_numbers<[1], [0], [0], [1], [0, 0, 1, 1], [], []>} : vector<2x64xf32>, vector<64x256xf32>, vector<2x256xf32> -> vector<2x256xf32>
    %305 = vector.extract_strided_slice %5 {offsets = [10, 0], sizes = [2, 128], strides = [1, 1]} : vector<16x256xf32> to vector<2x128xf32>
    %306 = vector.extract_strided_slice %5 {offsets = [4, 128], sizes = [2, 128], strides = [1, 1]} : vector<16x256xf32> to vector<2x128xf32>
    %307 = vector.extract_strided_slice %304 {offsets = [0, 0], sizes = [2, 128], strides = [1, 1]} : vector<2x256xf32> to vector<2x128xf32>
    %308 = arith.addf %305, %307 : vector<2x128xf32>
    %309 = vector.extract_strided_slice %308 {offsets = [0, 0], sizes = [2, 32], strides = [1, 1]} : vector<2x128xf32> to vector<2x32xf32>
    %310 = arith.negf %309 : vector<2x32xf32>
    %311 = math.exp %310 : vector<2x32xf32>
    %cst_54 = arith.constant 1.000000e+00 : f32
    %312 = vector.broadcast %cst_54 : f32 to vector<2x32xf32>
    %313 = arith.addf %312, %311 : vector<2x32xf32>
    %314 = arith.divf %312, %313 : vector<2x32xf32>
    %315 = vector.extract_strided_slice %308 {offsets = [0, 32], sizes = [2, 32], strides = [1, 1]} : vector<2x128xf32> to vector<2x32xf32>
    %316 = arith.negf %315 : vector<2x32xf32>
    %317 = math.exp %316 : vector<2x32xf32>
    %cst_55 = arith.constant 1.000000e+00 : f32
    %318 = vector.broadcast %cst_55 : f32 to vector<2x32xf32>
    %319 = arith.addf %318, %317 : vector<2x32xf32>
    %320 = arith.divf %318, %319 : vector<2x32xf32>
    %321 = vector.extract_strided_slice %308 {offsets = [0, 64], sizes = [2, 32], strides = [1, 1]} : vector<2x128xf32> to vector<2x32xf32>
    %322 = math.tanh %321 : vector<2x32xf32>
    %323 = vector.extract_strided_slice %308 {offsets = [0, 96], sizes = [2, 32], strides = [1, 1]} : vector<2x128xf32> to vector<2x32xf32>
    %324 = arith.negf %323 : vector<2x32xf32>
    %325 = math.exp %324 : vector<2x32xf32>
    %cst_56 = arith.constant 1.000000e+00 : f32
    %326 = vector.broadcast %cst_56 : f32 to vector<2x32xf32>
    %327 = arith.addf %326, %325 : vector<2x32xf32>
    %328 = arith.divf %326, %327 : vector<2x32xf32>
    %329 = arith.mulf %320, %272 : vector<2x32xf32>
    %330 = arith.mulf %314, %322 : vector<2x32xf32>
    %331 = arith.addf %329, %330 : vector<2x32xf32>
    %332 = math.tanh %331 : vector<2x32xf32>
    %333 = arith.mulf %328, %332 : vector<2x32xf32>
    %334 = vector.extract_strided_slice %304 {offsets = [0, 128], sizes = [2, 128], strides = [1, 1]} : vector<2x256xf32> to vector<2x128xf32>
    %335 = arith.addf %306, %334 : vector<2x128xf32>
    %336 = vector.extract_strided_slice %335 {offsets = [0, 0], sizes = [2, 32], strides = [1, 1]} : vector<2x128xf32> to vector<2x32xf32>
    %337 = arith.negf %336 : vector<2x32xf32>
    %338 = math.exp %337 : vector<2x32xf32>
    %cst_57 = arith.constant 1.000000e+00 : f32
    %339 = vector.broadcast %cst_57 : f32 to vector<2x32xf32>
    %340 = arith.addf %339, %338 : vector<2x32xf32>
    %341 = arith.divf %339, %340 : vector<2x32xf32>
    %342 = vector.extract_strided_slice %335 {offsets = [0, 32], sizes = [2, 32], strides = [1, 1]} : vector<2x128xf32> to vector<2x32xf32>
    %343 = arith.negf %342 : vector<2x32xf32>
    %344 = math.exp %343 : vector<2x32xf32>
    %cst_58 = arith.constant 1.000000e+00 : f32
    %345 = vector.broadcast %cst_58 : f32 to vector<2x32xf32>
    %346 = arith.addf %345, %344 : vector<2x32xf32>
    %347 = arith.divf %345, %346 : vector<2x32xf32>
    %348 = vector.extract_strided_slice %335 {offsets = [0, 64], sizes = [2, 32], strides = [1, 1]} : vector<2x128xf32> to vector<2x32xf32>
    %349 = math.tanh %348 : vector<2x32xf32>
    %350 = vector.extract_strided_slice %335 {offsets = [0, 96], sizes = [2, 32], strides = [1, 1]} : vector<2x128xf32> to vector<2x32xf32>
    %351 = arith.negf %350 : vector<2x32xf32>
    %352 = math.exp %351 : vector<2x32xf32>
    %cst_59 = arith.constant 1.000000e+00 : f32
    %353 = vector.broadcast %cst_59 : f32 to vector<2x32xf32>
    %354 = arith.addf %353, %352 : vector<2x32xf32>
    %355 = arith.divf %353, %354 : vector<2x32xf32>
    %356 = arith.mulf %347, %299 : vector<2x32xf32>
    %357 = arith.mulf %341, %349 : vector<2x32xf32>
    %358 = arith.addf %356, %357 : vector<2x32xf32>
    %359 = math.tanh %358 : vector<2x32xf32>
    %360 = arith.mulf %355, %359 : vector<2x32xf32>
    %361 = tpu.concatenate %333, %360 in 1 : vector<2x32xf32>, vector<2x32xf32> -> vector<2x64xf32>
    %c0_60 = arith.constant 0 : index
    %c0_61 = arith.constant 0 : index
    %362 = vector.load %arg3[%c0_60, %c0_61] : memref<64x256xf32, #tpu.memory_space<vmem>>, vector<64x256xf32>
    %cst_62 = arith.constant dense<0.000000e+00> : vector<2x256xf32>
    %363 = tpu.matmul %361, %362, %cst_62 {dimension_numbers = #tpu.dot_dimension_numbers<[1], [0], [0], [1], [0, 0, 1, 1], [], []>} : vector<2x64xf32>, vector<64x256xf32>, vector<2x256xf32> -> vector<2x256xf32>
    %364 = vector.extract_strided_slice %5 {offsets = [12, 0], sizes = [2, 128], strides = [1, 1]} : vector<16x256xf32> to vector<2x128xf32>
    %365 = vector.extract_strided_slice %5 {offsets = [2, 128], sizes = [2, 128], strides = [1, 1]} : vector<16x256xf32> to vector<2x128xf32>
    %366 = vector.extract_strided_slice %363 {offsets = [0, 0], sizes = [2, 128], strides = [1, 1]} : vector<2x256xf32> to vector<2x128xf32>
    %367 = arith.addf %364, %366 : vector<2x128xf32>
    %368 = vector.extract_strided_slice %367 {offsets = [0, 0], sizes = [2, 32], strides = [1, 1]} : vector<2x128xf32> to vector<2x32xf32>
    %369 = arith.negf %368 : vector<2x32xf32>
    %370 = math.exp %369 : vector<2x32xf32>
    %cst_63 = arith.constant 1.000000e+00 : f32
    %371 = vector.broadcast %cst_63 : f32 to vector<2x32xf32>
    %372 = arith.addf %371, %370 : vector<2x32xf32>
    %373 = arith.divf %371, %372 : vector<2x32xf32>
    %374 = vector.extract_strided_slice %367 {offsets = [0, 32], sizes = [2, 32], strides = [1, 1]} : vector<2x128xf32> to vector<2x32xf32>
    %375 = arith.negf %374 : vector<2x32xf32>
    %376 = math.exp %375 : vector<2x32xf32>
    %cst_64 = arith.constant 1.000000e+00 : f32
    %377 = vector.broadcast %cst_64 : f32 to vector<2x32xf32>
    %378 = arith.addf %377, %376 : vector<2x32xf32>
    %379 = arith.divf %377, %378 : vector<2x32xf32>
    %380 = vector.extract_strided_slice %367 {offsets = [0, 64], sizes = [2, 32], strides = [1, 1]} : vector<2x128xf32> to vector<2x32xf32>
    %381 = math.tanh %380 : vector<2x32xf32>
    %382 = vector.extract_strided_slice %367 {offsets = [0, 96], sizes = [2, 32], strides = [1, 1]} : vector<2x128xf32> to vector<2x32xf32>
    %383 = arith.negf %382 : vector<2x32xf32>
    %384 = math.exp %383 : vector<2x32xf32>
    %cst_65 = arith.constant 1.000000e+00 : f32
    %385 = vector.broadcast %cst_65 : f32 to vector<2x32xf32>
    %386 = arith.addf %385, %384 : vector<2x32xf32>
    %387 = arith.divf %385, %386 : vector<2x32xf32>
    %388 = arith.mulf %379, %331 : vector<2x32xf32>
    %389 = arith.mulf %373, %381 : vector<2x32xf32>
    %390 = arith.addf %388, %389 : vector<2x32xf32>
    %391 = math.tanh %390 : vector<2x32xf32>
    %392 = arith.mulf %387, %391 : vector<2x32xf32>
    %393 = vector.extract_strided_slice %363 {offsets = [0, 128], sizes = [2, 128], strides = [1, 1]} : vector<2x256xf32> to vector<2x128xf32>
    %394 = arith.addf %365, %393 : vector<2x128xf32>
    %395 = vector.extract_strided_slice %394 {offsets = [0, 0], sizes = [2, 32], strides = [1, 1]} : vector<2x128xf32> to vector<2x32xf32>
    %396 = arith.negf %395 : vector<2x32xf32>
    %397 = math.exp %396 : vector<2x32xf32>
    %cst_66 = arith.constant 1.000000e+00 : f32
    %398 = vector.broadcast %cst_66 : f32 to vector<2x32xf32>
    %399 = arith.addf %398, %397 : vector<2x32xf32>
    %400 = arith.divf %398, %399 : vector<2x32xf32>
    %401 = vector.extract_strided_slice %394 {offsets = [0, 32], sizes = [2, 32], strides = [1, 1]} : vector<2x128xf32> to vector<2x32xf32>
    %402 = arith.negf %401 : vector<2x32xf32>
    %403 = math.exp %402 : vector<2x32xf32>
    %cst_67 = arith.constant 1.000000e+00 : f32
    %404 = vector.broadcast %cst_67 : f32 to vector<2x32xf32>
    %405 = arith.addf %404, %403 : vector<2x32xf32>
    %406 = arith.divf %404, %405 : vector<2x32xf32>
    %407 = vector.extract_strided_slice %394 {offsets = [0, 64], sizes = [2, 32], strides = [1, 1]} : vector<2x128xf32> to vector<2x32xf32>
    %408 = math.tanh %407 : vector<2x32xf32>
    %409 = vector.extract_strided_slice %394 {offsets = [0, 96], sizes = [2, 32], strides = [1, 1]} : vector<2x128xf32> to vector<2x32xf32>
    %410 = arith.negf %409 : vector<2x32xf32>
    %411 = math.exp %410 : vector<2x32xf32>
    %cst_68 = arith.constant 1.000000e+00 : f32
    %412 = vector.broadcast %cst_68 : f32 to vector<2x32xf32>
    %413 = arith.addf %412, %411 : vector<2x32xf32>
    %414 = arith.divf %412, %413 : vector<2x32xf32>
    %415 = arith.mulf %406, %358 : vector<2x32xf32>
    %416 = arith.mulf %400, %408 : vector<2x32xf32>
    %417 = arith.addf %415, %416 : vector<2x32xf32>
    %418 = math.tanh %417 : vector<2x32xf32>
    %419 = arith.mulf %414, %418 : vector<2x32xf32>
    %420 = tpu.concatenate %392, %419 in 1 : vector<2x32xf32>, vector<2x32xf32> -> vector<2x64xf32>
    %c0_69 = arith.constant 0 : index
    %c0_70 = arith.constant 0 : index
    %421 = vector.load %arg3[%c0_69, %c0_70] : memref<64x256xf32, #tpu.memory_space<vmem>>, vector<64x256xf32>
    %cst_71 = arith.constant dense<0.000000e+00> : vector<2x256xf32>
    %422 = tpu.matmul %420, %421, %cst_71 {dimension_numbers = #tpu.dot_dimension_numbers<[1], [0], [0], [1], [0, 0, 1, 1], [], []>} : vector<2x64xf32>, vector<64x256xf32>, vector<2x256xf32> -> vector<2x256xf32>
    %423 = vector.extract_strided_slice %5 {offsets = [14, 0], sizes = [2, 128], strides = [1, 1]} : vector<16x256xf32> to vector<2x128xf32>
    %424 = vector.extract_strided_slice %5 {offsets = [0, 128], sizes = [2, 128], strides = [1, 1]} : vector<16x256xf32> to vector<2x128xf32>
    %425 = vector.extract_strided_slice %422 {offsets = [0, 0], sizes = [2, 128], strides = [1, 1]} : vector<2x256xf32> to vector<2x128xf32>
    %426 = arith.addf %423, %425 : vector<2x128xf32>
    %427 = vector.extract_strided_slice %426 {offsets = [0, 0], sizes = [2, 32], strides = [1, 1]} : vector<2x128xf32> to vector<2x32xf32>
    %428 = arith.negf %427 : vector<2x32xf32>
    %429 = math.exp %428 : vector<2x32xf32>
    %cst_72 = arith.constant 1.000000e+00 : f32
    %430 = vector.broadcast %cst_72 : f32 to vector<2x32xf32>
    %431 = arith.addf %430, %429 : vector<2x32xf32>
    %432 = arith.divf %430, %431 : vector<2x32xf32>
    %433 = vector.extract_strided_slice %426 {offsets = [0, 32], sizes = [2, 32], strides = [1, 1]} : vector<2x128xf32> to vector<2x32xf32>
    %434 = arith.negf %433 : vector<2x32xf32>
    %435 = math.exp %434 : vector<2x32xf32>
    %cst_73 = arith.constant 1.000000e+00 : f32
    %436 = vector.broadcast %cst_73 : f32 to vector<2x32xf32>
    %437 = arith.addf %436, %435 : vector<2x32xf32>
    %438 = arith.divf %436, %437 : vector<2x32xf32>
    %439 = vector.extract_strided_slice %426 {offsets = [0, 64], sizes = [2, 32], strides = [1, 1]} : vector<2x128xf32> to vector<2x32xf32>
    %440 = math.tanh %439 : vector<2x32xf32>
    %441 = vector.extract_strided_slice %426 {offsets = [0, 96], sizes = [2, 32], strides = [1, 1]} : vector<2x128xf32> to vector<2x32xf32>
    %442 = arith.negf %441 : vector<2x32xf32>
    %443 = math.exp %442 : vector<2x32xf32>
    %cst_74 = arith.constant 1.000000e+00 : f32
    %444 = vector.broadcast %cst_74 : f32 to vector<2x32xf32>
    %445 = arith.addf %444, %443 : vector<2x32xf32>
    %446 = arith.divf %444, %445 : vector<2x32xf32>
    %447 = arith.mulf %438, %390 : vector<2x32xf32>
    %448 = arith.mulf %432, %440 : vector<2x32xf32>
    %449 = arith.addf %447, %448 : vector<2x32xf32>
    %450 = math.tanh %449 : vector<2x32xf32>
    %451 = arith.mulf %446, %450 : vector<2x32xf32>
    %452 = vector.extract_strided_slice %422 {offsets = [0, 128], sizes = [2, 128], strides = [1, 1]} : vector<2x256xf32> to vector<2x128xf32>
    %453 = arith.addf %424, %452 : vector<2x128xf32>
    %454 = vector.extract_strided_slice %453 {offsets = [0, 0], sizes = [2, 32], strides = [1, 1]} : vector<2x128xf32> to vector<2x32xf32>
    %455 = arith.negf %454 : vector<2x32xf32>
    %456 = math.exp %455 : vector<2x32xf32>
    %cst_75 = arith.constant 1.000000e+00 : f32
    %457 = vector.broadcast %cst_75 : f32 to vector<2x32xf32>
    %458 = arith.addf %457, %456 : vector<2x32xf32>
    %459 = arith.divf %457, %458 : vector<2x32xf32>
    %460 = vector.extract_strided_slice %453 {offsets = [0, 32], sizes = [2, 32], strides = [1, 1]} : vector<2x128xf32> to vector<2x32xf32>
    %461 = arith.negf %460 : vector<2x32xf32>
    %462 = math.exp %461 : vector<2x32xf32>
    %cst_76 = arith.constant 1.000000e+00 : f32
    %463 = vector.broadcast %cst_76 : f32 to vector<2x32xf32>
    %464 = arith.addf %463, %462 : vector<2x32xf32>
    %465 = arith.divf %463, %464 : vector<2x32xf32>
    %466 = vector.extract_strided_slice %453 {offsets = [0, 64], sizes = [2, 32], strides = [1, 1]} : vector<2x128xf32> to vector<2x32xf32>
    %467 = math.tanh %466 : vector<2x32xf32>
    %468 = vector.extract_strided_slice %453 {offsets = [0, 96], sizes = [2, 32], strides = [1, 1]} : vector<2x128xf32> to vector<2x32xf32>
    %469 = arith.negf %468 : vector<2x32xf32>
    %470 = math.exp %469 : vector<2x32xf32>
    %cst_77 = arith.constant 1.000000e+00 : f32
    %471 = vector.broadcast %cst_77 : f32 to vector<2x32xf32>
    %472 = arith.addf %471, %470 : vector<2x32xf32>
    %473 = arith.divf %471, %472 : vector<2x32xf32>
    %474 = arith.mulf %465, %417 : vector<2x32xf32>
    %475 = arith.mulf %459, %467 : vector<2x32xf32>
    %476 = arith.addf %474, %475 : vector<2x32xf32>
    %477 = math.tanh %476 : vector<2x32xf32>
    %478 = arith.mulf %473, %477 : vector<2x32xf32>
    %479 = tpu.concatenate %451, %478 in 1 : vector<2x32xf32>, vector<2x32xf32> -> vector<2x64xf32>
    %c0_78 = arith.constant 0 : index
    %c0_79 = arith.constant 0 : index
    %480 = vector.load %arg4[%c0_78, %c0_79] : memref<64x64xf32, #tpu.memory_space<vmem>>, vector<64x64xf32>
    %cst_80 = arith.constant dense<0.000000e+00> : vector<2x64xf32>
    %481 = tpu.matmul %479, %480, %cst_80 {dimension_numbers = #tpu.dot_dimension_numbers<[1], [0], [0], [1], [0, 0, 1, 1], [], []>} : vector<2x64xf32>, vector<64x64xf32>, vector<2x64xf32> -> vector<2x64xf32>
    %c0_81 = arith.constant 0 : index
    %c0_82 = arith.constant 0 : index
    %482 = vector.load %arg5[%c0_81, %c0_82] : memref<1x64xf32, #tpu.memory_space<vmem>>, vector<1x64xf32>
    %483 = vector.broadcast %482 : vector<1x64xf32> to vector<2x64xf32>
    %484 = arith.addf %481, %483 : vector<2x64xf32>
    %cst_83 = arith.constant 0.000000e+00 : f32
    %485 = vector.broadcast %cst_83 : f32 to vector<2x64xf32>
    %486 = arith.maximumf %484, %485 : vector<2x64xf32>
    %c0_84 = arith.constant 0 : index
    %c0_85 = arith.constant 0 : index
    %487 = vector.load %arg6[%c0_84, %c0_85] : memref<64x3xf32, #tpu.memory_space<vmem>>, vector<64x3xf32>
    %cst_86 = arith.constant dense<0.000000e+00> : vector<2x3xf32>
    %488 = tpu.matmul %486, %487, %cst_86 {dimension_numbers = #tpu.dot_dimension_numbers<[1], [0], [0], [1], [0, 0, 1, 1], [], []>} : vector<2x64xf32>, vector<64x3xf32>, vector<2x3xf32> -> vector<2x3xf32>
    %c0_87 = arith.constant 0 : index
    %c0_88 = arith.constant 0 : index
    %489 = vector.load %arg7[%c0_87, %c0_88] : memref<1x3xf32, #tpu.memory_space<vmem>>, vector<1x3xf32>
    %490 = vector.broadcast %489 : vector<1x3xf32> to vector<2x3xf32>
    %491 = arith.addf %488, %490 : vector<2x3xf32>
    %c0_89 = arith.constant 0 : index
    %c0_90 = arith.constant 0 : index
    %492 = vector.load %arg8[%c0_89, %c0_90] : memref<2x3xf32, #tpu.memory_space<vmem>>, vector<2x3xf32>
    tpu.vector_store %arg8[%c0_89, %c0_90], %491 {strides = array<i32>} : memref<2x3xf32, #tpu.memory_space<vmem>>, vector<2x3xf32>,
    return
  }
}

</mosaic_0001>

<llo_original>
// kernel: lstm_classifier_forward.1
$region0: #{lstm_classifier_forward.1}
  #allocation0 [shape = 'u32[]', space=smem, size = 0x4, offset = 0x4, fixed_abs, tag = 'smem constant byte address 0x4 - core index']
  #allocation1 [shape = 'u32[144,128]{1,0:T(1,128)}', space=vmem, size = 0x12000, scoped, tag = 'internal scratch']
  %s0 = inlined_call_operand.vmem [shape: f32[16,300], index: 0, kind: input, shape index: {}]
  %s1 = inlined_call_operand.vmem [shape: f32[300,256], index: 1, kind: input, shape index: {}]
  %s2 = inlined_call_operand.vmem [shape: f32[1,256], index: 2, kind: input, shape index: {}]
  %s3 = inlined_call_operand.vmem [shape: f32[64,256], index: 3, kind: input, shape index: {}]
  %s4 = inlined_call_operand.vmem [shape: f32[64,64], index: 4, kind: input, shape index: {}]
  %s5 = inlined_call_operand.vmem [shape: f32[1,64], index: 5, kind: input, shape index: {}]
  %s6 = inlined_call_operand.vmem [shape: f32[64,3], index: 6, kind: input, shape index: {}]
  %s7 = inlined_call_operand.vmem [shape: f32[1,3], index: 7, kind: input, shape index: {}]
  %s8 = inlined_call_operand.hbm [shape: f32[2,3], index: 8, kind: output, shape index: {}]
  %s9 = sld [smem:[#allocation0]]
  $region42: #{lstm_classifier_forward.1} parent=0
    _
  %s11 = ssub.s32 1, %s9
  %s12 = scalar_select 0, %s11, %s9
  $region1: #{lstm_classifier_forward.1} parent=0
    #allocation2 [shape = 'u8[1024]{0}', space=vmem, size = 0x400, scoped, tag = 'output window, operand 0, single buffered']
    #allocation3 [shape = 's32[1]{0}', space=sflag, size = 0x4, scoped, tag = 'scoped memory for lstm_classifier_forward.1']
    %13 = vsyncpa [#allocation3], 0
    // Predicated region
    $region2: #{lstm_classifier_forward.1} parent=1 // pred_check
      _
    $region3: #{lstm_classifier_forward.1} parent=1 // pred_check_branch
      %15 = sbr.rel (0) target = $region5
    $region4: #{lstm_classifier_forward.1} parent=1 // pred_region
      _
    $region5: #{lstm_classifier_forward.1} parent=1 // pred_fallthru
      _
    // Predicated region
    $region6: #{lstm_classifier_forward.1} parent=1 // pred_check
      _
    $region7: #{lstm_classifier_forward.1} parent=1 // pred_check_branch
      %17 = sbr.rel (0) target = $region9
    $region8: #{lstm_classifier_forward.1} parent=1 // pred_region
      _
    $region9: #{lstm_classifier_forward.1} parent=1 // pred_fallthru
      _
    // Predicated region
    $region10: #{lstm_classifier_forward.1} parent=1 // pred_check
      _
    $region11: #{lstm_classifier_forward.1} parent=1 // pred_check_branch
      %19 = sbr.rel (0) target = $region13
    $region12: #{lstm_classifier_forward.1} parent=1 // pred_region
      _
    $region13: #{lstm_classifier_forward.1} parent=1 // pred_fallthru
      _
    // Predicated region
    $region14: #{lstm_classifier_forward.1} parent=1 // pred_check
      _
    $region15: #{lstm_classifier_forward.1} parent=1 // pred_check_branch
      %21 = sbr.rel (0) target = $region17
    $region16: #{lstm_classifier_forward.1} parent=1 // pred_region
      _
    $region17: #{lstm_classifier_forward.1} parent=1 // pred_fallthru
      _
    // Predicated region
    $region18: #{lstm_classifier_forward.1} parent=1 // pred_check
      _
    $region19: #{lstm_classifier_forward.1} parent=1 // pred_check_branch
      %23 = sbr.rel (0) target = $region21
    $region20: #{lstm_classifier_forward.1} parent=1 // pred_region
      _
    $region21: #{lstm_classifier_forward.1} parent=1 // pred_fallthru
      _
    // Predicated region
    $region22: #{lstm_classifier_forward.1} parent=1 // pred_check
      _
    $region23: #{lstm_classifier_forward.1} parent=1 // pred_check_branch
      %25 = sbr.rel (0) target = $region25
    $region24: #{lstm_classifier_forward.1} parent=1 // pred_region
      _
    $region25: #{lstm_classifier_forward.1} parent=1 // pred_fallthru
      _
    // Predicated region
    $region26: #{lstm_classifier_forward.1} parent=1 // pred_check
      _
    $region27: #{lstm_classifier_forward.1} parent=1 // pred_check_branch
      %27 = sbr.rel (0) target = $region29
    $region28: #{lstm_classifier_forward.1} parent=1 // pred_region
      _
    $region29: #{lstm_classifier_forward.1} parent=1 // pred_fallthru
      _
    // Predicated region
    $region30: #{lstm_classifier_forward.1} parent=1 // pred_check
      _
    $region31: #{lstm_classifier_forward.1} parent=1 // pred_check_branch
      %29 = sbr.rel (0) target = $region33
    $region32: #{lstm_classifier_forward.1} parent=1 // pred_region
      _
    $region33: #{lstm_classifier_forward.1} parent=1 // pred_fallthru
      _
    %v30 = vld [vmem:[%s0] sm:$0xff]
    %v31 = vld [vmem:[%s0 + $0x8] sm:$0xff]
    %v32 = vld [vmem:[%s0 + $0x10] sm:$0xff]
    %v33 = vld [vmem:[%s0 + $0x18] sm:$0xff]
    %v34 = vld [vmem:[%s0 + $0x20] sm:$0xff]
    %v35 = vld [vmem:[%s0 + $0x28] sm:$0xff]
    %v36 = vld [vmem:[%s1] sm:$0xff]
    %v37 = vld [vmem:[%s1 + $0x8] sm:$0xff]
    %v38 = vld [vmem:[%s1 + $0x10] sm:$0xff]
    %v39 = vld [vmem:[%s1 + $0x18] sm:$0xff]
    %v40 = vld [vmem:[%s1 + $0x20] sm:$0xff]
    %v41 = vld [vmem:[%s1 + $0x28] sm:$0xff]
    %v42 = vld [vmem:[%s1 + $0x30] sm:$0xff]
    %v43 = vld [vmem:[%s1 + $0x38] sm:$0xff]
    %v44 = vld [vmem:[%s1 + $0x40] sm:$0xff]
    %v45 = vld [vmem:[%s1 + $0x48] sm:$0xff]
    %v46 = vld [vmem:[%s1 + $0x50] sm:$0xff]
    %v47 = vld [vmem:[%s1 + $0x58] sm:$0xff]
    %v48 = vld [vmem:[%s1 + $0x60] sm:$0xff]
    %v49 = vld [vmem:[%s1 + $0x68] sm:$0xff]
    %v50 = vld [vmem:[%s1 + $0x70] sm:$0xff]
    %v51 = vld [vmem:[%s1 + $0x78] sm:$0xff]
    %v52 = vld [vmem:[%s1 + $0x80] sm:$0xff]
    %v53 = vld [vmem:[%s1 + $0x88] sm:$0xff]
    %v54 = vld [vmem:[%s1 + $0x90] sm:$0xff]
    %v55 = vld [vmem:[%s1 + $0x98] sm:$0xff]
    %v56 = vld [vmem:[%s1 + $0xa0] sm:$0xff]
    %v57 = vld [vmem:[%s1 + $0xa8] sm:$0xff]
    %v58 = vld [vmem:[%s1 + $0xb0] sm:$0xff]
    %v59 = vld [vmem:[%s1 + $0xb8] sm:$0xff]
    %v60 = vld [vmem:[%s1 + $0xc0] sm:$0xff]
    %v61 = vld [vmem:[%s1 + $0xc8] sm:$0xff]
    %v62 = vld [vmem:[%s1 + $0xd0] sm:$0xff]
    %v63 = vld [vmem:[%s1 + $0xd8] sm:$0xff]
    %v64 = vld [vmem:[%s1 + $0xe0] sm:$0xff]
    %v65 = vld [vmem:[%s1 + $0xe8] sm:$0xff]
    %v66 = vld [vmem:[%s1 + $0xf0] sm:$0xff]
    %v67 = vld [vmem:[%s1 + $0xf8] sm:$0xff]
    %v68 = vld [vmem:[%s1 + $0x100] sm:$0xff]
    %v69 = vld [vmem:[%s1 + $0x108] sm:$0xff]
    %v70 = vld [vmem:[%s1 + $0x110] sm:$0xff]
    %v71 = vld [vmem:[%s1 + $0x118] sm:$0xff]
    %v72 = vld [vmem:[%s1 + $0x120] sm:$0xff]
    %v73 = vld [vmem:[%s1 + $0x128] sm:$0xff]
    %v74 = vld [vmem:[%s1 + $0x130] sm:$0xff]
    %v75 = vld [vmem:[%s1 + $0x138] sm:$0xff]
    %v76 = vld [vmem:[%s1 + $0x140] sm:$0xff]
    %v77 = vld [vmem:[%s1 + $0x148] sm:$0xff]
    %v78 = vld [vmem:[%s1 + $0x150] sm:$0xff]
    %v79 = vld [vmem:[%s1 + $0x158] sm:$0xff]
    %v80 = vld [vmem:[%s1 + $0x160] sm:$0xff]
    %v81 = vld [vmem:[%s1 + $0x168] sm:$0xff]
    %v82 = vld [vmem:[%s1 + $0x170] sm:$0xff]
    %v83 = vld [vmem:[%s1 + $0x178] sm:$0xff]
    %v84 = vld [vmem:[%s1 + $0x180] sm:$0xff]
    %v85 = vld [vmem:[%s1 + $0x188] sm:$0xff]
    %v86 = vld [vmem:[%s1 + $0x190] sm:$0xff]
    %v87 = vld [vmem:[%s1 + $0x198] sm:$0xff]
    %v88 = vld [vmem:[%s1 + $0x1a0] sm:$0xff]
    %v89 = vld [vmem:[%s1 + $0x1a8] sm:$0xff]
    %v90 = vld [vmem:[%s1 + $0x1b0] sm:$0xff]
    %v91 = vld [vmem:[%s1 + $0x1b8] sm:$0xff]
    %v92 = vld [vmem:[%s1 + $0x1c0] sm:$0xff]
    %v93 = vld [vmem:[%s1 + $0x1c8] sm:$0xff]
    %v94 = vld [vmem:[%s1 + $0x1d0] sm:$0xff]
    %v95 = vld [vmem:[%s1 + $0x1d8] sm:$0xff]
    %v96 = vld [vmem:[%s1 + $0x1e0] sm:$0xff]
    %v97 = vld [vmem:[%s1 + $0x1e8] sm:$0xff]
    %v98 = vld [vmem:[%s1 + $0x1f0] sm:$0xff]
    %v99 = vld [vmem:[%s1 + $0x1f8] sm:$0xff]
    %v100 = vld [vmem:[%s1 + $0x200] sm:$0xff]
    %v101 = vld [vmem:[%s1 + $0x208] sm:$0xff]
    %v102 = vld [vmem:[%s1 + $0x210] sm:$0xff]
    %v103 = vld [vmem:[%s1 + $0x218] sm:$0xff]
    %v104 = vld [vmem:[%s1 + $0x220] sm:$0xff]
    %v105 = vld [vmem:[%s1 + $0x228] sm:$0xff]
    %v106 = vld [vmem:[%s1 + $0x230] sm:$0xff]
    %v107 = vld [vmem:[%s1 + $0x238] sm:$0xff]
    %v108 = vld [vmem:[%s1 + $0x240] sm:$0xff]
    %v109 = vld [vmem:[%s1 + $0x248] sm:$0xff]
    %v110 = vld [vmem:[%s1 + $0x250] sm:$0xf]
    %v111 = vld [vmem:[%s1 + $0x258] sm:$0xf]
    %v112 = vld [vmem:[%s2] sm:$0x3]
    %v114 = vlaneseq
    %v115 = vshrl.u32 %v114, 7
    %v116 = vsub.s32 0, %v115
    %v117 = vrot.slane %v112, %v116
    %v118 = vlaneseq
    %v119 = vshrl.u32 %v118, 7
    %v120 = vsub.s32 1, %v119
    %v121 = vrot.slane %v112, %v120
    %vm124 = vcmask 359424
    %v126 = vsel %vm124, %v32, 0
    %v129 = vsel %vm124, %v35, 0
    %vm131 = vcmask 1043456
    %v133 = vsel %vm131, %v110, 0
    %v136 = vsel %vm131, %v111, 0
    %138 = vmatprep.subr.mxu0 %v37
    %139 = vmatpush1.msra.mxu0 %v36
    %140 = vmatprep.subr.mxu0 %v39
    %141 = vmatpush1.msra.mxu0 %v38
    %142 = vmatprep.subr.mxu0 %v41
    %143 = vmatpush1.msra.mxu0 %v40
    %144 = vmatprep.subr.mxu0 %v43
    %145 = vmatpush1.msra.mxu0 %v42
    %146 = vmatprep.subr.mxu0 %v45
    %147 = vmatpush1.msra.mxu0 %v44
    %148 = vmatprep.subr.mxu0 %v47
    %149 = vmatpush1.msra.mxu0 %v46
    %150 = vmatprep.subr.mxu0 %v49
    %151 = vmatpush1.msra.mxu0 %v48
    %152 = vmatprep.subr.mxu0 %v51
    %153 = vmatpush1.msra.mxu0 %v50
    %154 = vmatprep.subr.mxu0 %v53
    %155 = vmatpush1.msra.mxu0 %v52
    %156 = vmatprep.subr.mxu0 %v55
    %157 = vmatpush1.msra.mxu0 %v54
    %158 = vmatprep.subr.mxu0 %v57
    %159 = vmatpush1.msra.mxu0 %v56
    %160 = vmatprep.subr.mxu0 %v59
    %161 = vmatpush1.msra.mxu0 %v58
    %162 = vmatprep.subr.mxu0 %v61
    %163 = vmatpush1.msra.mxu0 %v60
    %164 = vmatprep.subr.mxu0 %v63
    %165 = vmatpush1.msra.mxu0 %v62
    %166 = vmatprep.subr.mxu0 %v65
    %167 = vmatpush1.msra.mxu0 %v64
    %168 = vmatprep.subr.mxu0 %v67
    %169 = vmatpush1.msra.mxu0 %v66
    %170 = vmatprep.subr.mxu0 %v69
    %171 = vmatpush1.msra.mxu0 %v68
    %172 = vmatprep.subr.mxu0 %v71
    %173 = vmatpush1.msra.mxu0 %v70
    %174 = vmatprep.subr.mxu0 %v73
    %175 = vmatpush1.msra.mxu0 %v72
    %176 = vmatprep.subr.mxu0 %v75
    %177 = vmatpush1.msra.mxu0 %v74
    %178 = vmatprep.subr.mxu0 %v77
    %179 = vmatpush1.msra.mxu0 %v76
    %180 = vmatprep.subr.mxu0 %v79
    %181 = vmatpush1.msra.mxu0 %v78
    %182 = vmatprep.subr.mxu0 %v81
    %183 = vmatpush1.msra.mxu0 %v80
    %184 = vmatprep.subr.mxu0 %v83
    %185 = vmatpush1.msra.mxu0 %v82
    %186 = vmatprep.subr.mxu0 %v85
    %187 = vmatpush1.msra.mxu0 %v84
    %188 = vmatprep.subr.mxu0 %v87
    %189 = vmatpush1.msra.mxu0 %v86
    %190 = vmatprep.subr.mxu0 %v89
    %191 = vmatpush1.msra.mxu0 %v88
    %192 = vmatprep.subr.mxu0 %v91
    %193 = vmatpush1.msra.mxu0 %v90
    %194 = vmatprep.subr.mxu0 %v93
    %195 = vmatpush1.msra.mxu0 %v92
    %196 = vmatprep.subr.mxu0 %v95
    %197 = vmatpush1.msra.mxu0 %v94
    %198 = vmatprep.subr.mxu0 %v97
    %199 = vmatpush1.msra.mxu0 %v96
    %200 = vmatprep.subr.mxu0 %v99
    %201 = vmatpush1.msra.mxu0 %v98
    %202 = vmatprep.mubr.f32.mxu0 %v31
    %203 = vmatmul.mubr.f32.gmra.mrb[0].mxu0 %v30
    %v204 = vpop.f32.mrb[0].mxu0
    %v205 = vadd.f32 %v117, %v204
    %v206 = vpop.f32.mrb[0].mxu0
    %v207 = vadd.f32 %v121, %v206
    %208 = vmatprep.mubr.f32.mxu0 %v34
    %209 = vmatmul.mubr.f32.gmra.mrb[0].mxu0 %v33
    %v210 = vpop.f32.mrb[0].mxu0
    %v211 = vadd.f32 %v117, %v210
    %v212 = vpop.f32.mrb[0].mxu0
    %v213 = vadd.f32 %v121, %v212
    %214 = vdwg.mxu0
    %215 = vmatprep.subr.mxu0 %v101
    %216 = vmatpush1.msra.mxu0 %v100
    %217 = vmatprep.subr.mxu0 %v103
    %218 = vmatpush1.msra.mxu0 %v102
    %219 = vmatprep.subr.mxu0 %v105
    %220 = vmatpush1.msra.mxu0 %v104
    %221 = vmatprep.subr.mxu0 %v107
    %222 = vmatpush1.msra.mxu0 %v106
    %223 = vmatprep.subr.mxu0 %v109
    %224 = vmatpush1.msra.mxu0 %v108
    %225 = vmatprep.subr.mxu0 %v136
    %226 = vmatpush1.msra.mxu0 %v133
    %227 = vmatprep.subr.mxu0 0.0
    %228 = vmatpush1.msra.mxu0 0.0
    %229 = vmatprep.subr.mxu0 0.0
    %230 = vmatpush1.msra.mxu0 0.0
    %231 = vmatprep.subr.mxu0 0.0
    %232 = vmatpush1.msra.mxu0 0.0
    %233 = vmatprep.subr.mxu0 0.0
    %234 = vmatpush1.msra.mxu0 0.0
    %235 = vmatprep.subr.mxu0 0.0
    %236 = vmatpush1.msra.mxu0 0.0
    %237 = vmatprep.subr.mxu0 0.0
    %238 = vmatpush1.msra.mxu0 0.0
    %239 = vmatprep.subr.mxu0 0.0
    %240 = vmatpush1.msra.mxu0 0.0
    %241 = vmatprep.subr.mxu0 0.0
    %242 = vmatpush1.msra.mxu0 0.0
    %243 = vmatprep.subr.mxu0 0.0
    %244 = vmatpush1.msra.mxu0 0.0
    %245 = vmatprep.subr.mxu0 0.0
    %246 = vmatpush1.msra.mxu0 0.0
    %247 = vmatprep.subr.mxu0 0.0
    %248 = vmatpush1.msra.mxu0 0.0
    %249 = vmatprep.subr.mxu0 0.0
    %250 = vmatpush1.msra.mxu0 0.0
    %251 = vmatprep.subr.mxu0 0.0
    %252 = vmatpush1.msra.mxu0 0.0
    %253 = vmatprep.subr.mxu0 0.0
    %254 = vmatpush1.msra.mxu0 0.0
    %255 = vmatprep.subr.mxu0 0.0
    %256 = vmatpush1.msra.mxu0 0.0
    %257 = vmatprep.subr.mxu0 0.0
    %258 = vmatpush1.msra.mxu0 0.0
    %259 = vmatprep.subr.mxu0 0.0
    %260 = vmatpush1.msra.mxu0 0.0
    %261 = vmatprep.subr.mxu0 0.0
    %262 = vmatpush1.msra.mxu0 0.0
    %263 = vmatprep.subr.mxu0 0.0
    %264 = vmatpush1.msra.mxu0 0.0
    %265 = vmatprep.subr.mxu0 0.0
    %266 = vmatpush1.msra.mxu0 0.0
    %267 = vmatprep.subr.mxu0 0.0
    %268 = vmatpush1.msra.mxu0 0.0
    %269 = vmatprep.subr.mxu0 0.0
    %270 = vmatpush1.msra.mxu0 0.0
    %271 = vmatprep.subr.mxu0 0.0
    %272 = vmatpush1.msra.mxu0 0.0
    %273 = vmatprep.subr.mxu0 0.0
    %274 = vmatpush1.msra.mxu0 0.0
    %275 = vmatprep.subr.mxu0 0.0
    %276 = vmatpush1.msra.mxu0 0.0
    %277 = vmatprep.subr.mxu0 0.0
    %278 = vmatpush1.msra.mxu0 0.0
    %279 = vmatprep.mubr.f32.mxu0 0.0
    %280 = vmatmul.mubr.f32.gmra.mrb[0].mxu0 %v126
    %v281 = vpop.f32.mrb[0].mxu0
    %v282 = vadd.f32 %v205, %v281
    %v283 = vpop.f32.mrb[0].mxu0
    %v284 = vadd.f32 %v207, %v283
    %285 = vmatprep.mubr.f32.mxu0 0.0
    %286 = vmatmul.mubr.f32.gmra.mrb[0].mxu0 %v129
    %v287 = vpop.f32.mrb[0].mxu0
    %v288 = vadd.f32 %v211, %v287
    %v289 = vpop.f32.mrb[0].mxu0
    %v290 = vadd.f32 %v213, %v289
    %291 = vdwg.mxu0
    %v292 = vld [vmem:[%s3] sm:$0xff]
    %v293 = vld [vmem:[%s3 + $0x8] sm:$0xff]
    %v294 = vld [vmem:[%s3 + $0x10] sm:$0xff]
    %v295 = vld [vmem:[%s3 + $0x18] sm:$0xff]
    %v296 = vld [vmem:[%s3 + $0x20] sm:$0xff]
    %v297 = vld [vmem:[%s3 + $0x28] sm:$0xff]
    %v298 = vld [vmem:[%s3 + $0x30] sm:$0xff]
    %v299 = vld [vmem:[%s3 + $0x38] sm:$0xff]
    %v300 = vld [vmem:[%s3 + $0x40] sm:$0xff]
    %v301 = vld [vmem:[%s3 + $0x48] sm:$0xff]
    %v302 = vld [vmem:[%s3 + $0x50] sm:$0xff]
    %v303 = vld [vmem:[%s3 + $0x58] sm:$0xff]
    %v304 = vld [vmem:[%s3 + $0x60] sm:$0xff]
    %v305 = vld [vmem:[%s3 + $0x68] sm:$0xff]
    %v306 = vld [vmem:[%s3 + $0x70] sm:$0xff]
    %v307 = vld [vmem:[%s3 + $0x78] sm:$0xff]
    %vm308 = vcmask 523264
    %v310 = vsel %vm308, 0.0, 0
    %312 = vmatprep.subr.mxu0 %v293
    %313 = vmatpush1.msra.mxu0 %v292
    %314 = vmatprep.subr.mxu0 %v295
    %315 = vmatpush1.msra.mxu0 %v294
    %316 = vmatprep.subr.mxu0 %v297
    %317 = vmatpush1.msra.mxu0 %v296
    %318 = vmatprep.subr.mxu0 %v299
    %319 = vmatpush1.msra.mxu0 %v298
    %320 = vmatprep.subr.mxu0 %v301
    %321 = vmatpush1.msra.mxu0 %v300
    %322 = vmatprep.subr.mxu0 %v303
    %323 = vmatpush1.msra.mxu0 %v302
    %324 = vmatprep.subr.mxu0 %v305
    %325 = vmatpush1.msra.mxu0 %v304
    %326 = vmatprep.subr.mxu0 %v307
    %327 = vmatpush1.msra.mxu0 %v306
    %328 = vmatprep.subr.mxu0 0.0
    %329 = vmatpush1.msra.mxu0 0.0
    %330 = vmatprep.subr.mxu0 0.0
    %331 = vmatpush1.msra.mxu0 0.0
    %332 = vmatprep.subr.mxu0 0.0
    %333 = vmatpush1.msra.mxu0 0.0
    %334 = vmatprep.subr.mxu0 0.0
    %335 = vmatpush1.msra.mxu0 0.0
    %336 = vmatprep.subr.mxu0 0.0
    %337 = vmatpush1.msra.mxu0 0.0
    %338 = vmatprep.subr.mxu0 0.0
    %339 = vmatpush1.msra.mxu0 0.0
    %340 = vmatprep.subr.mxu0 0.0
    %341 = vmatpush1.msra.mxu0 0.0
    %342 = vmatprep.subr.mxu0 0.0
    %343 = vmatpush1.msra.mxu0 0.0
    %344 = vmatprep.subr.mxu0 0.0
    %345 = vmatpush1.msra.mxu0 0.0
    %346 = vmatprep.subr.mxu0 0.0
    %347 = vmatpush1.msra.mxu0 0.0
    %348 = vmatprep.subr.mxu0 0.0
    %349 = vmatpush1.msra.mxu0 0.0
    %350 = vmatprep.subr.mxu0 0.0
    %351 = vmatpush1.msra.mxu0 0.0
    %352 = vmatprep.subr.mxu0 0.0
    %353 = vmatpush1.msra.mxu0 0.0
    %354 = vmatprep.subr.mxu0 0.0
    %355 = vmatpush1.msra.mxu0 0.0
    %356 = vmatprep.subr.mxu0 0.0
    %357 = vmatpush1.msra.mxu0 0.0
    %358 = vmatprep.subr.mxu0 0.0
    %359 = vmatpush1.msra.mxu0 0.0
    %360 = vmatprep.subr.mxu0 0.0
    %361 = vmatpush1.msra.mxu0 0.0
    %362 = vmatprep.subr.mxu0 0.0
    %363 = vmatpush1.msra.mxu0 0.0
    %364 = vmatprep.subr.mxu0 0.0
    %365 = vmatpush1.msra.mxu0 0.0
    %366 = vmatprep.subr.mxu0 0.0
    %367 = vmatpush1.msra.mxu0 0.0
    %368 = vmatprep.subr.mxu0 0.0
    %369 = vmatpush1.msra.mxu0 0.0
    %370 = vmatprep.subr.mxu0 0.0
    %371 = vmatpush1.msra.mxu0 0.0
    %372 = vmatprep.subr.mxu0 0.0
    %373 = vmatpush1.msra.mxu0 0.0
    %374 = vmatprep.subr.mxu0 0.0
    %375 = vmatpush1.msra.mxu0 0.0
    %376 = vmatprep.mubr.f32.mxu0 0.0
    %377 = vmatmul.mubr.f32.gmra.mrb[0].mxu0 %v310
    %v378 = vpop.f32.mrb[0].mxu0
    %v379 = vadd.f32 0.0, %v378
    %v380 = vpop.f32.mrb[0].mxu0
    %v381 = vadd.f32 0.0, %v380
    %382 = vdwg.mxu0
    %v383 = vadd.f32 %v282, %v379
    %v384 = vxor.u32 %v383, 2147483648
    %v385 = vmul.f32 %v384, 1.442695
    %v386 = vpow.pop %v385
    %v387 = vadd.f32 %v386, 1.0
    %v388 = vrcp.pop %v387
    %v389 = vmul.f32 1.0, %v388
    %v390 = vtanh.pop %v383
    %v391 = vmul.f32 %v389, 0.0
    %393 = vrot.lane.b32.xlu0 %v390, 64
    %v394 = vpop.permute.xlu0 %393
    %v396 = vmul.f32 %v389, %v394
    %398 = vrot.lane.b32.xlu0 %v396, 32
    %v399 = vpop.permute.xlu0 %398
    %v401 = vadd.f32 %v391, %v399
    %v402 = vtanh.pop %v401
    %404 = vrot.lane.b32.xlu0 %v402, 64
    %v405 = vpop.permute.xlu0 %404
    %v407 = vmul.f32 %v389, %v405
    %v409 = vrot.slane %v381, 2
    %v411 = vadd.f32 %v290, %v409
    %v412 = vxor.u32 %v411, 2147483648
    %v413 = vmul.f32 %v412, 1.442695
    %v414 = vpow.pop %v413
    %v415 = vadd.f32 %v414, 1.0
    %v416 = vrcp.pop %v415
    %v417 = vmul.f32 1.0, %v416
    %v418 = vtanh.pop %v411
    %v419 = vmul.f32 %v417, 0.0
    %421 = vrot.lane.b32.xlu0 %v418, 64
    %v422 = vpop.permute.xlu0 %421
    %v424 = vmul.f32 %v417, %v422
    %426 = vrot.lane.b32.xlu0 %v424, 32
    %v427 = vpop.permute.xlu0 %426
    %v429 = vadd.f32 %v419, %v427
    %v430 = vtanh.pop %v429
    %432 = vrot.lane.b32.xlu0 %v430, 64
    %v433 = vpop.permute.xlu0 %432
    %v435 = vmul.f32 %v417, %v433
    %437 = vrot.lane.b32.xlu0 %v407, 32
    %v438 = vpop.permute.xlu0 %437
    %v441 = vrot.slane %v435, 6
    %442 = vrot.lane.b32.xlu0 %v441, 64
    %v443 = vpop.permute.xlu0 %442
    %vm445 = vcmask 261120
    %v446 = vsel %vm445, %v438, %v443
    %v448 = vsel %vm308, %v446, 0
    %450 = vmatprep.subr.mxu0 %v293
    %451 = vmatpush1.msra.mxu0 %v292
    %452 = vmatprep.subr.mxu0 %v295
    %453 = vmatpush1.msra.mxu0 %v294
    %454 = vmatprep.subr.mxu0 %v297
    %455 = vmatpush1.msra.mxu0 %v296
    %456 = vmatprep.subr.mxu0 %v299
    %457 = vmatpush1.msra.mxu0 %v298
    %458 = vmatprep.subr.mxu0 %v301
    %459 = vmatpush1.msra.mxu0 %v300
    %460 = vmatprep.subr.mxu0 %v303
    %461 = vmatpush1.msra.mxu0 %v302
    %462 = vmatprep.subr.mxu0 %v305
    %463 = vmatpush1.msra.mxu0 %v304
    %464 = vmatprep.subr.mxu0 %v307
    %465 = vmatpush1.msra.mxu0 %v306
    %466 = vmatprep.subr.mxu0 0.0
    %467 = vmatpush1.msra.mxu0 0.0
    %468 = vmatprep.subr.mxu0 0.0
    %469 = vmatpush1.msra.mxu0 0.0
    %470 = vmatprep.subr.mxu0 0.0
    %471 = vmatpush1.msra.mxu0 0.0
    %472 = vmatprep.subr.mxu0 0.0
    %473 = vmatpush1.msra.mxu0 0.0
    %474 = vmatprep.subr.mxu0 0.0
    %475 = vmatpush1.msra.mxu0 0.0
    %476 = vmatprep.subr.mxu0 0.0
    %477 = vmatpush1.msra.mxu0 0.0
    %478 = vmatprep.subr.mxu0 0.0
    %479 = vmatpush1.msra.mxu0 0.0
    %480 = vmatprep.subr.mxu0 0.0
    %481 = vmatpush1.msra.mxu0 0.0
    %482 = vmatprep.subr.mxu0 0.0
    %483 = vmatpush1.msra.mxu0 0.0
    %484 = vmatprep.subr.mxu0 0.0
    %485 = vmatpush1.msra.mxu0 0.0
    %486 = vmatprep.subr.mxu0 0.0
    %487 = vmatpush1.msra.mxu0 0.0
    %488 = vmatprep.subr.mxu0 0.0
    %489 = vmatpush1.msra.mxu0 0.0
    %490 = vmatprep.subr.mxu0 0.0
    %491 = vmatpush1.msra.mxu0 0.0
    %492 = vmatprep.subr.mxu0 0.0
    %493 = vmatpush1.msra.mxu0 0.0
    %494 = vmatprep.subr.mxu0 0.0
    %495 = vmatpush1.msra.mxu0 0.0
    %496 = vmatprep.subr.mxu0 0.0
    %497 = vmatpush1.msra.mxu0 0.0
    %498 = vmatprep.subr.mxu0 0.0
    %499 = vmatpush1.msra.mxu0 0.0
    %500 = vmatprep.subr.mxu0 0.0
    %501 = vmatpush1.msra.mxu0 0.0
    %502 = vmatprep.subr.mxu0 0.0
    %503 = vmatpush1.msra.mxu0 0.0
    %504 = vmatprep.subr.mxu0 0.0
    %505 = vmatpush1.msra.mxu0 0.0
    %506 = vmatprep.subr.mxu0 0.0
    %507 = vmatpush1.msra.mxu0 0.0
    %508 = vmatprep.subr.mxu0 0.0
    %509 = vmatpush1.msra.mxu0 0.0
    %510 = vmatprep.subr.mxu0 0.0
    %511 = vmatpush1.msra.mxu0 0.0
    %512 = vmatprep.subr.mxu0 0.0
    %513 = vmatpush1.msra.mxu0 0.0
    %514 = vmatprep.mubr.f32.mxu0 0.0
    %515 = vmatmul.mubr.f32.gmra.mrb[0].mxu0 %v448
    %v516 = vpop.f32.mrb[0].mxu0
    %v517 = vadd.f32 0.0, %v516
    %v518 = vpop.f32.mrb[0].mxu0
    %v519 = vadd.f32 0.0, %v518
    %520 = vdwg.mxu0
    %v522 = vrot.slane %v517, 6
    %v524 = vadd.f32 %v282, %v522
    %v525 = vxor.u32 %v524, 2147483648
    %v526 = vmul.f32 %v525, 1.442695
    %v527 = vpow.pop %v526
    %v528 = vadd.f32 %v527, 1.0
    %v529 = vrcp.pop %v528
    %v530 = vmul.f32 1.0, %v529
    %v531 = vtanh.pop %v524
    %v533 = vrot.slane %v401, 6
    %v535 = vmul.f32 %v530, %v533
    %537 = vrot.lane.b32.xlu0 %v531, 64
    %v538 = vpop.permute.xlu0 %537
    %v540 = vmul.f32 %v530, %v538
    %542 = vrot.lane.b32.xlu0 %v540, 32
    %v543 = vpop.permute.xlu0 %542
    %v545 = vadd.f32 %v535, %v543
    %v546 = vtanh.pop %v545
    %548 = vrot.lane.b32.xlu0 %v546, 64
    %v549 = vpop.permute.xlu0 %548
    %v551 = vmul.f32 %v530, %v549
    %v553 = vrot.slane %v519, 4
    %v555 = vadd.f32 %v290, %v553
    %v556 = vxor.u32 %v555, 2147483648
    %v557 = vmul.f32 %v556, 1.442695
    %v558 = vpow.pop %v557
    %v559 = vadd.f32 %v558, 1.0
    %v560 = vrcp.pop %v559
    %v561 = vmul.f32 1.0, %v560
    %v562 = vtanh.pop %v555
    %v564 = vrot.slane %v429, 2
    %v566 = vmul.f32 %v561, %v564
    %568 = vrot.lane.b32.xlu0 %v562, 64
    %v569 = vpop.permute.xlu0 %568
    %v571 = vmul.f32 %v561, %v569
    %573 = vrot.lane.b32.xlu0 %v571, 32
    %v574 = vpop.permute.xlu0 %573
    %v576 = vadd.f32 %v566, %v574
    %v577 = vtanh.pop %v576
    %579 = vrot.lane.b32.xlu0 %v577, 64
    %v580 = vpop.permute.xlu0 %579
    %v582 = vmul.f32 %v561, %v580
    %584 = vrot.lane.b32.xlu0 %v551, 32
    %v585 = vpop.permute.xlu0 %584
    %v588 = vrot.slane %v582, 2
    %589 = vrot.lane.b32.xlu0 %v588, 64
    %v590 = vpop.permute.xlu0 %589
    %v592 = vsel %vm445, %v585, %v590
    %v594 = vrot.slane %v592, 2
    %v595 = vsel %vm308, %v594, 0
    %597 = vmatprep.subr.mxu0 %v293
    %598 = vmatpush1.msra.mxu0 %v292
    %599 = vmatprep.subr.mxu0 %v295
    %600 = vmatpush1.msra.mxu0 %v294
    %601 = vmatprep.subr.mxu0 %v297
    %602 = vmatpush1.msra.mxu0 %v296
    %603 = vmatprep.subr.mxu0 %v299
    %604 = vmatpush1.msra.mxu0 %v298
    %605 = vmatprep.subr.mxu0 %v301
    %606 = vmatpush1.msra.mxu0 %v300
    %607 = vmatprep.subr.mxu0 %v303
    %608 = vmatpush1.msra.mxu0 %v302
    %609 = vmatprep.subr.mxu0 %v305
    %610 = vmatpush1.msra.mxu0 %v304
    %611 = vmatprep.subr.mxu0 %v307
    %612 = vmatpush1.msra.mxu0 %v306
    %613 = vmatprep.subr.mxu0 0.0
    %614 = vmatpush1.msra.mxu0 0.0
    %615 = vmatprep.subr.mxu0 0.0
    %616 = vmatpush1.msra.mxu0 0.0
    %617 = vmatprep.subr.mxu0 0.0
    %618 = vmatpush1.msra.mxu0 0.0
    %619 = vmatprep.subr.mxu0 0.0
    %620 = vmatpush1.msra.mxu0 0.0
    %621 = vmatprep.subr.mxu0 0.0
    %622 = vmatpush1.msra.mxu0 0.0
    %623 = vmatprep.subr.mxu0 0.0
    %624 = vmatpush1.msra.mxu0 0.0
    %625 = vmatprep.subr.mxu0 0.0
    %626 = vmatpush1.msra.mxu0 0.0
    %627 = vmatprep.subr.mxu0 0.0
    %628 = vmatpush1.msra.mxu0 0.0
    %629 = vmatprep.subr.mxu0 0.0
    %630 = vmatpush1.msra.mxu0 0.0
    %631 = vmatprep.subr.mxu0 0.0
    %632 = vmatpush1.msra.mxu0 0.0
    %633 = vmatprep.subr.mxu0 0.0
    %634 = vmatpush1.msra.mxu0 0.0
    %635 = vmatprep.subr.mxu0 0.0
    %636 = vmatpush1.msra.mxu0 0.0
    %637 = vmatprep.subr.mxu0 0.0
    %638 = vmatpush1.msra.mxu0 0.0
    %639 = vmatprep.subr.mxu0 0.0
    %640 = vmatpush1.msra.mxu0 0.0
    %641 = vmatprep.subr.mxu0 0.0
    %642 = vmatpush1.msra.mxu0 0.0
    %643 = vmatprep.subr.mxu0 0.0
    %644 = vmatpush1.msra.mxu0 0.0
    %645 = vmatprep.subr.mxu0 0.0
    %646 = vmatpush1.msra.mxu0 0.0
    %647 = vmatprep.subr.mxu0 0.0
    %648 = vmatpush1.msra.mxu0 0.0
    %649 = vmatprep.subr.mxu0 0.0
    %650 = vmatpush1.msra.mxu0 0.0
    %651 = vmatprep.subr.mxu0 0.0
    %652 = vmatpush1.msra.mxu0 0.0
    %653 = vmatprep.subr.mxu0 0.0
    %654 = vmatpush1.msra.mxu0 0.0
    %655 = vmatprep.subr.mxu0 0.0
    %656 = vmatpush1.msra.mxu0 0.0
    %657 = vmatprep.subr.mxu0 0.0
    %658 = vmatpush1.msra.mxu0 0.0
    %659 = vmatprep.subr.mxu0 0.0
    %660 = vmatpush1.msra.mxu0 0.0
    %661 = vmatprep.mubr.f32.mxu0 0.0
    %662 = vmatmul.mubr.f32.gmra.mrb[0].mxu0 %v595
    %v663 = vpop.f32.mrb[0].mxu0
    %v664 = vadd.f32 0.0, %v663
    %v665 = vpop.f32.mrb[0].mxu0
    %v666 = vadd.f32 0.0, %v665
    %667 = vdwg.mxu0
    %v669 = vrot.slane %v664, 4
    %v671 = vadd.f32 %v282, %v669
    %v672 = vxor.u32 %v671, 2147483648
    %v673 = vmul.f32 %v672, 1.442695
    %v674 = vpow.pop %v673
    %v675 = vadd.f32 %v674, 1.0
    %v676 = vrcp.pop %v675
    %v677 = vmul.f32 1.0, %v676
    %v678 = vtanh.pop %v671
    %v680 = vrot.slane %v545, 6
    %v682 = vmul.f32 %v677, %v680
    %684 = vrot.lane.b32.xlu0 %v678, 64
    %v685 = vpop.permute.xlu0 %684
    %v687 = vmul.f32 %v677, %v685
    %689 = vrot.lane.b32.xlu0 %v687, 32
    %v690 = vpop.permute.xlu0 %689
    %v692 = vadd.f32 %v682, %v690
    %v693 = vtanh.pop %v692
    %695 = vrot.lane.b32.xlu0 %v693, 64
    %v696 = vpop.permute.xlu0 %695
    %v698 = vmul.f32 %v677, %v696
    %v700 = vrot.slane %v666, 6
    %v702 = vadd.f32 %v290, %v700
    %v703 = vxor.u32 %v702, 2147483648
    %v704 = vmul.f32 %v703, 1.442695
    %v705 = vpow.pop %v704
    %v706 = vadd.f32 %v705, 1.0
    %v707 = vrcp.pop %v706
    %v708 = vmul.f32 1.0, %v707
    %v709 = vtanh.pop %v702
    %v711 = vrot.slane %v576, 2
    %v713 = vmul.f32 %v708, %v711
    %715 = vrot.lane.b32.xlu0 %v709, 64
    %v716 = vpop.permute.xlu0 %715
    %v718 = vmul.f32 %v708, %v716
    %720 = vrot.lane.b32.xlu0 %v718, 32
    %v721 = vpop.permute.xlu0 %720
    %v723 = vadd.f32 %v713, %v721
    %v724 = vtanh.pop %v723
    %726 = vrot.lane.b32.xlu0 %v724, 64
    %v727 = vpop.permute.xlu0 %726
    %v729 = vmul.f32 %v708, %v727
    %731 = vrot.lane.b32.xlu0 %v698, 32
    %v732 = vpop.permute.xlu0 %731
    %v735 = vrot.slane %v729, 6
    %736 = vrot.lane.b32.xlu0 %v735, 64
    %v737 = vpop.permute.xlu0 %736
    %v739 = vsel %vm445, %v732, %v737
    %v741 = vrot.slane %v739, 4
    %v742 = vsel %vm308, %v741, 0
    %744 = vmatprep.subr.mxu0 %v293
    %745 = vmatpush1.msra.mxu0 %v292
    %746 = vmatprep.subr.mxu0 %v295
    %747 = vmatpush1.msra.mxu0 %v294
    %748 = vmatprep.subr.mxu0 %v297
    %749 = vmatpush1.msra.mxu0 %v296
    %750 = vmatprep.subr.mxu0 %v299
    %751 = vmatpush1.msra.mxu0 %v298
    %752 = vmatprep.subr.mxu0 %v301
    %753 = vmatpush1.msra.mxu0 %v300
    %754 = vmatprep.subr.mxu0 %v303
    %755 = vmatpush1.msra.mxu0 %v302
    %756 = vmatprep.subr.mxu0 %v305
    %757 = vmatpush1.msra.mxu0 %v304
    %758 = vmatprep.subr.mxu0 %v307
    %759 = vmatpush1.msra.mxu0 %v306
    %760 = vmatprep.subr.mxu0 0.0
    %761 = vmatpush1.msra.mxu0 0.0
    %762 = vmatprep.subr.mxu0 0.0
    %763 = vmatpush1.msra.mxu0 0.0
    %764 = vmatprep.subr.mxu0 0.0
    %765 = vmatpush1.msra.mxu0 0.0
    %766 = vmatprep.subr.mxu0 0.0
    %767 = vmatpush1.msra.mxu0 0.0
    %768 = vmatprep.subr.mxu0 0.0
    %769 = vmatpush1.msra.mxu0 0.0
    %770 = vmatprep.subr.mxu0 0.0
    %771 = vmatpush1.msra.mxu0 0.0
    %772 = vmatprep.subr.mxu0 0.0
    %773 = vmatpush1.msra.mxu0 0.0
    %774 = vmatprep.subr.mxu0 0.0
    %775 = vmatpush1.msra.mxu0 0.0
    %776 = vmatprep.subr.mxu0 0.0
    %777 = vmatpush1.msra.mxu0 0.0
    %778 = vmatprep.subr.mxu0 0.0
    %779 = vmatpush1.msra.mxu0 0.0
    %780 = vmatprep.subr.mxu0 0.0
    %781 = vmatpush1.msra.mxu0 0.0
    %782 = vmatprep.subr.mxu0 0.0
    %783 = vmatpush1.msra.mxu0 0.0
    %784 = vmatprep.subr.mxu0 0.0
    %785 = vmatpush1.msra.mxu0 0.0
    %786 = vmatprep.subr.mxu0 0.0
    %787 = vmatpush1.msra.mxu0 0.0
    %788 = vmatprep.subr.mxu0 0.0
    %789 = vmatpush1.msra.mxu0 0.0
    %790 = vmatprep.subr.mxu0 0.0
    %791 = vmatpush1.msra.mxu0 0.0
    %792 = vmatprep.subr.mxu0 0.0
    %793 = vmatpush1.msra.mxu0 0.0
    %794 = vmatprep.subr.mxu0 0.0
    %795 = vmatpush1.msra.mxu0 0.0
    %796 = vmatprep.subr.mxu0 0.0
    %797 = vmatpush1.msra.mxu0 0.0
    %798 = vmatprep.subr.mxu0 0.0
    %799 = vmatpush1.msra.mxu0 0.0
    %800 = vmatprep.subr.mxu0 0.0
    %801 = vmatpush1.msra.mxu0 0.0
    %802 = vmatprep.subr.mxu0 0.0
    %803 = vmatpush1.msra.mxu0 0.0
    %804 = vmatprep.subr.mxu0 0.0
    %805 = vmatpush1.msra.mxu0 0.0
    %806 = vmatprep.subr.mxu0 0.0
    %807 = vmatpush1.msra.mxu0 0.0
    %808 = vmatprep.mubr.f32.mxu0 0.0
    %809 = vmatmul.mubr.f32.gmra.mrb[0].mxu0 %v742
    %v810 = vpop.f32.mrb[0].mxu0
    %v811 = vadd.f32 0.0, %v810
    %v812 = vpop.f32.mrb[0].mxu0
    %v813 = vadd.f32 0.0, %v812
    %814 = vdwg.mxu0
    %v816 = vrot.slane %v811, 2
    %v818 = vadd.f32 %v282, %v816
    %v819 = vxor.u32 %v818, 2147483648
    %v820 = vmul.f32 %v819, 1.442695
    %v821 = vpow.pop %v820
    %v822 = vadd.f32 %v821, 1.0
    %v823 = vrcp.pop %v822
    %v824 = vmul.f32 1.0, %v823
    %v825 = vtanh.pop %v818
    %v827 = vrot.slane %v692, 6
    %v829 = vmul.f32 %v824, %v827
    %831 = vrot.lane.b32.xlu0 %v825, 64
    %v832 = vpop.permute.xlu0 %831
    %v834 = vmul.f32 %v824, %v832
    %836 = vrot.lane.b32.xlu0 %v834, 32
    %v837 = vpop.permute.xlu0 %836
    %v839 = vadd.f32 %v829, %v837
    %v840 = vtanh.pop %v839
    %842 = vrot.lane.b32.xlu0 %v840, 64
    %v843 = vpop.permute.xlu0 %842
    %v845 = vmul.f32 %v824, %v843
    %v846 = vadd.f32 %v290, %v813
    %v847 = vxor.u32 %v846, 2147483648
    %v848 = vmul.f32 %v847, 1.442695
    %v849 = vpow.pop %v848
    %v850 = vadd.f32 %v849, 1.0
    %v851 = vrcp.pop %v850
    %v852 = vmul.f32 1.0, %v851
    %v853 = vtanh.pop %v846
    %v855 = vrot.slane %v723, 2
    %v857 = vmul.f32 %v852, %v855
    %859 = vrot.lane.b32.xlu0 %v853, 64
    %v860 = vpop.permute.xlu0 %859
    %v862 = vmul.f32 %v852, %v860
    %864 = vrot.lane.b32.xlu0 %v862, 32
    %v865 = vpop.permute.xlu0 %864
    %v867 = vadd.f32 %v857, %v865
    %v868 = vtanh.pop %v867
    %870 = vrot.lane.b32.xlu0 %v868, 64
    %v871 = vpop.permute.xlu0 %870
    %v873 = vmul.f32 %v852, %v871
    %875 = vrot.lane.b32.xlu0 %v845, 32
    %v876 = vpop.permute.xlu0 %875
    %v879 = vrot.slane %v873, 2
    %880 = vrot.lane.b32.xlu0 %v879, 64
    %v881 = vpop.permute.xlu0 %880
    %v883 = vsel %vm445, %v876, %v881
    %v885 = vrot.slane %v883, 6
    %v886 = vsel %vm308, %v885, 0
    %888 = vmatprep.subr.mxu0 %v293
    %889 = vmatpush1.msra.mxu0 %v292
    %890 = vmatprep.subr.mxu0 %v295
    %891 = vmatpush1.msra.mxu0 %v294
    %892 = vmatprep.subr.mxu0 %v297
    %893 = vmatpush1.msra.mxu0 %v296
    %894 = vmatprep.subr.mxu0 %v299
    %895 = vmatpush1.msra.mxu0 %v298
    %896 = vmatprep.subr.mxu0 %v301
    %897 = vmatpush1.msra.mxu0 %v300
    %898 = vmatprep.subr.mxu0 %v303
    %899 = vmatpush1.msra.mxu0 %v302
    %900 = vmatprep.subr.mxu0 %v305
    %901 = vmatpush1.msra.mxu0 %v304
    %902 = vmatprep.subr.mxu0 %v307
    %903 = vmatpush1.msra.mxu0 %v306
    %904 = vmatprep.subr.mxu0 0.0
    %905 = vmatpush1.msra.mxu0 0.0
    %906 = vmatprep.subr.mxu0 0.0
    %907 = vmatpush1.msra.mxu0 0.0
    %908 = vmatprep.subr.mxu0 0.0
    %909 = vmatpush1.msra.mxu0 0.0
    %910 = vmatprep.subr.mxu0 0.0
    %911 = vmatpush1.msra.mxu0 0.0
    %912 = vmatprep.subr.mxu0 0.0
    %913 = vmatpush1.msra.mxu0 0.0
    %914 = vmatprep.subr.mxu0 0.0
    %915 = vmatpush1.msra.mxu0 0.0
    %916 = vmatprep.subr.mxu0 0.0
    %917 = vmatpush1.msra.mxu0 0.0
    %918 = vmatprep.subr.mxu0 0.0
    %919 = vmatpush1.msra.mxu0 0.0
    %920 = vmatprep.subr.mxu0 0.0
    %921 = vmatpush1.msra.mxu0 0.0
    %922 = vmatprep.subr.mxu0 0.0
    %923 = vmatpush1.msra.mxu0 0.0
    %924 = vmatprep.subr.mxu0 0.0
    %925 = vmatpush1.msra.mxu0 0.0
    %926 = vmatprep.subr.mxu0 0.0
    %927 = vmatpush1.msra.mxu0 0.0
    %928 = vmatprep.subr.mxu0 0.0
    %929 = vmatpush1.msra.mxu0 0.0
    %930 = vmatprep.subr.mxu0 0.0
    %931 = vmatpush1.msra.mxu0 0.0
    %932 = vmatprep.subr.mxu0 0.0
    %933 = vmatpush1.msra.mxu0 0.0
    %934 = vmatprep.subr.mxu0 0.0
    %935 = vmatpush1.msra.mxu0 0.0
    %936 = vmatprep.subr.mxu0 0.0
    %937 = vmatpush1.msra.mxu0 0.0
    %938 = vmatprep.subr.mxu0 0.0
    %939 = vmatpush1.msra.mxu0 0.0
    %940 = vmatprep.subr.mxu0 0.0
    %941 = vmatpush1.msra.mxu0 0.0
    %942 = vmatprep.subr.mxu0 0.0
    %943 = vmatpush1.msra.mxu0 0.0
    %944 = vmatprep.subr.mxu0 0.0
    %945 = vmatpush1.msra.mxu0 0.0
    %946 = vmatprep.subr.mxu0 0.0
    %947 = vmatpush1.msra.mxu0 0.0
    %948 = vmatprep.subr.mxu0 0.0
    %949 = vmatpush1.msra.mxu0 0.0
    %950 = vmatprep.subr.mxu0 0.0
    %951 = vmatpush1.msra.mxu0 0.0
    %952 = vmatprep.mubr.f32.mxu0 0.0
    %953 = vmatmul.mubr.f32.gmra.mrb[0].mxu0 %v886
    %v954 = vpop.f32.mrb[0].mxu0
    %v955 = vadd.f32 0.0, %v954
    %v956 = vpop.f32.mrb[0].mxu0
    %v957 = vadd.f32 0.0, %v956
    %958 = vdwg.mxu0
    %v959 = vadd.f32 %v288, %v955
    %v960 = vxor.u32 %v959, 2147483648
    %v961 = vmul.f32 %v960, 1.442695
    %v962 = vpow.pop %v961
    %v963 = vadd.f32 %v962, 1.0
    %v964 = vrcp.pop %v963
    %v965 = vmul.f32 1.0, %v964
    %v966 = vtanh.pop %v959
    %v968 = vrot.slane %v839, 6
    %v970 = vmul.f32 %v965, %v968
    %972 = vrot.lane.b32.xlu0 %v966, 64
    %v973 = vpop.permute.xlu0 %972
    %v975 = vmul.f32 %v965, %v973
    %977 = vrot.lane.b32.xlu0 %v975, 32
    %v978 = vpop.permute.xlu0 %977
    %v980 = vadd.f32 %v970, %v978
    %v981 = vtanh.pop %v980
    %983 = vrot.lane.b32.xlu0 %v981, 64
    %v984 = vpop.permute.xlu0 %983
    %v986 = vmul.f32 %v965, %v984
    %v988 = vrot.slane %v957, 2
    %v990 = vadd.f32 %v284, %v988
    %v991 = vxor.u32 %v990, 2147483648
    %v992 = vmul.f32 %v991, 1.442695
    %v993 = vpow.pop %v992
    %v994 = vadd.f32 %v993, 1.0
    %v995 = vrcp.pop %v994
    %v996 = vmul.f32 1.0, %v995
    %v997 = vtanh.pop %v990
    %v999 = vrot.slane %v867, 2
    %v1001 = vmul.f32 %v996, %v999
    %1003 = vrot.lane.b32.xlu0 %v997, 64
    %v1004 = vpop.permute.xlu0 %1003
    %v1006 = vmul.f32 %v996, %v1004
    %1008 = vrot.lane.b32.xlu0 %v1006, 32
    %v1009 = vpop.permute.xlu0 %1008
    %v1011 = vadd.f32 %v1001, %v1009
    %v1012 = vtanh.pop %v1011
    %1014 = vrot.lane.b32.xlu0 %v1012, 64
    %v1015 = vpop.permute.xlu0 %1014
    %v1017 = vmul.f32 %v996, %v1015
    %1019 = vrot.lane.b32.xlu0 %v986, 32
    %v1020 = vpop.permute.xlu0 %1019
    %v1023 = vrot.slane %v1017, 6
    %1024 = vrot.lane.b32.xlu0 %v1023, 64
    %v1025 = vpop.permute.xlu0 %1024
    %v1027 = vsel %vm445, %v1020, %v1025
    %v1029 = vsel %vm308, %v1027, 0
    %1031 = vmatprep.subr.mxu0 %v293
    %1032 = vmatpush1.msra.mxu0 %v292
    %1033 = vmatprep.subr.mxu0 %v295
    %1034 = vmatpush1.msra.mxu0 %v294
    %1035 = vmatprep.subr.mxu0 %v297
    %1036 = vmatpush1.msra.mxu0 %v296
    %1037 = vmatprep.subr.mxu0 %v299
    %1038 = vmatpush1.msra.mxu0 %v298
    %1039 = vmatprep.subr.mxu0 %v301
    %1040 = vmatpush1.msra.mxu0 %v300
    %1041 = vmatprep.subr.mxu0 %v303
    %1042 = vmatpush1.msra.mxu0 %v302
    %1043 = vmatprep.subr.mxu0 %v305
    %1044 = vmatpush1.msra.mxu0 %v304
    %1045 = vmatprep.subr.mxu0 %v307
    %1046 = vmatpush1.msra.mxu0 %v306
    %1047 = vmatprep.subr.mxu0 0.0
    %1048 = vmatpush1.msra.mxu0 0.0
    %1049 = vmatprep.subr.mxu0 0.0
    %1050 = vmatpush1.msra.mxu0 0.0
    %1051 = vmatprep.subr.mxu0 0.0
    %1052 = vmatpush1.msra.mxu0 0.0
    %1053 = vmatprep.subr.mxu0 0.0
    %1054 = vmatpush1.msra.mxu0 0.0
    %1055 = vmatprep.subr.mxu0 0.0
    %1056 = vmatpush1.msra.mxu0 0.0
    %1057 = vmatprep.subr.mxu0 0.0
    %1058 = vmatpush1.msra.mxu0 0.0
    %1059 = vmatprep.subr.mxu0 0.0
    %1060 = vmatpush1.msra.mxu0 0.0
    %1061 = vmatprep.subr.mxu0 0.0
    %1062 = vmatpush1.msra.mxu0 0.0
    %1063 = vmatprep.subr.mxu0 0.0
    %1064 = vmatpush1.msra.mxu0 0.0
    %1065 = vmatprep.subr.mxu0 0.0
    %1066 = vmatpush1.msra.mxu0 0.0
    %1067 = vmatprep.subr.mxu0 0.0
    %1068 = vmatpush1.msra.mxu0 0.0
    %1069 = vmatprep.subr.mxu0 0.0
    %1070 = vmatpush1.msra.mxu0 0.0
    %1071 = vmatprep.subr.mxu0 0.0
    %1072 = vmatpush1.msra.mxu0 0.0
    %1073 = vmatprep.subr.mxu0 0.0
    %1074 = vmatpush1.msra.mxu0 0.0
    %1075 = vmatprep.subr.mxu0 0.0
    %1076 = vmatpush1.msra.mxu0 0.0
    %1077 = vmatprep.subr.mxu0 0.0
    %1078 = vmatpush1.msra.mxu0 0.0
    %1079 = vmatprep.subr.mxu0 0.0
    %1080 = vmatpush1.msra.mxu0 0.0
    %1081 = vmatprep.subr.mxu0 0.0
    %1082 = vmatpush1.msra.mxu0 0.0
    %1083 = vmatprep.subr.mxu0 0.0
    %1084 = vmatpush1.msra.mxu0 0.0
    %1085 = vmatprep.subr.mxu0 0.0
    %1086 = vmatpush1.msra.mxu0 0.0
    %1087 = vmatprep.subr.mxu0 0.0
    %1088 = vmatpush1.msra.mxu0 0.0
    %1089 = vmatprep.subr.mxu0 0.0
    %1090 = vmatpush1.msra.mxu0 0.0
    %1091 = vmatprep.subr.mxu0 0.0
    %1092 = vmatpush1.msra.mxu0 0.0
    %1093 = vmatprep.subr.mxu0 0.0
    %1094 = vmatpush1.msra.mxu0 0.0
    %1095 = vmatprep.mubr.f32.mxu0 0.0
    %1096 = vmatmul.mubr.f32.gmra.mrb[0].mxu0 %v1029
    %v1097 = vpop.f32.mrb[0].mxu0
    %v1098 = vadd.f32 0.0, %v1097
    %v1099 = vpop.f32.mrb[0].mxu0
    %v1100 = vadd.f32 0.0, %v1099
    %1101 = vdwg.mxu0
    %v1103 = vrot.slane %v1098, 6
    %v1105 = vadd.f32 %v288, %v1103
    %v1106 = vxor.u32 %v1105, 2147483648
    %v1107 = vmul.f32 %v1106, 1.442695
    %v1108 = vpow.pop %v1107
    %v1109 = vadd.f32 %v1108, 1.0
    %v1110 = vrcp.pop %v1109
    %v1111 = vmul.f32 1.0, %v1110
    %v1112 = vtanh.pop %v1105
    %v1114 = vrot.slane %v980, 6
    %v1116 = vmul.f32 %v1111, %v1114
    %1118 = vrot.lane.b32.xlu0 %v1112, 64
    %v1119 = vpop.permute.xlu0 %1118
    %v1121 = vmul.f32 %v1111, %v1119
    %1123 = vrot.lane.b32.xlu0 %v1121, 32
    %v1124 = vpop.permute.xlu0 %1123
    %v1126 = vadd.f32 %v1116, %v1124
    %v1127 = vtanh.pop %v1126
    %1129 = vrot.lane.b32.xlu0 %v1127, 64
    %v1130 = vpop.permute.xlu0 %1129
    %v1132 = vmul.f32 %v1111, %v1130
    %v1134 = vrot.slane %v1100, 4
    %v1136 = vadd.f32 %v284, %v1134
    %v1137 = vxor.u32 %v1136, 2147483648
    %v1138 = vmul.f32 %v1137, 1.442695
    %v1139 = vpow.pop %v1138
    %v1140 = vadd.f32 %v1139, 1.0
    %v1141 = vrcp.pop %v1140
    %v1142 = vmul.f32 1.0, %v1141
    %v1143 = vtanh.pop %v1136
    %v1145 = vrot.slane %v1011, 2
    %v1147 = vmul.f32 %v1142, %v1145
    %1149 = vrot.lane.b32.xlu0 %v1143, 64
    %v1150 = vpop.permute.xlu0 %1149
    %v1152 = vmul.f32 %v1142, %v1150
    %1154 = vrot.lane.b32.xlu0 %v1152, 32
    %v1155 = vpop.permute.xlu0 %1154
    %v1157 = vadd.f32 %v1147, %v1155
    %v1158 = vtanh.pop %v1157
    %1160 = vrot.lane.b32.xlu0 %v1158, 64
    %v1161 = vpop.permute.xlu0 %1160
    %v1163 = vmul.f32 %v1142, %v1161
    %1165 = vrot.lane.b32.xlu0 %v1132, 32
    %v1166 = vpop.permute.xlu0 %1165
    %v1169 = vrot.slane %v1163, 2
    %1170 = vrot.lane.b32.xlu0 %v1169, 64
    %v1171 = vpop.permute.xlu0 %1170
    %v1173 = vsel %vm445, %v1166, %v1171
    %v1175 = vrot.slane %v1173, 2
    %v1176 = vsel %vm308, %v1175, 0
    %1178 = vmatprep.subr.mxu0 %v293
    %1179 = vmatpush1.msra.mxu0 %v292
    %1180 = vmatprep.subr.mxu0 %v295
    %1181 = vmatpush1.msra.mxu0 %v294
    %1182 = vmatprep.subr.mxu0 %v297
    %1183 = vmatpush1.msra.mxu0 %v296
    %1184 = vmatprep.subr.mxu0 %v299
    %1185 = vmatpush1.msra.mxu0 %v298
    %1186 = vmatprep.subr.mxu0 %v301
    %1187 = vmatpush1.msra.mxu0 %v300
    %1188 = vmatprep.subr.mxu0 %v303
    %1189 = vmatpush1.msra.mxu0 %v302
    %1190 = vmatprep.subr.mxu0 %v305
    %1191 = vmatpush1.msra.mxu0 %v304
    %1192 = vmatprep.subr.mxu0 %v307
    %1193 = vmatpush1.msra.mxu0 %v306
    %1194 = vmatprep.subr.mxu0 0.0
    %1195 = vmatpush1.msra.mxu0 0.0
    %1196 = vmatprep.subr.mxu0 0.0
    %1197 = vmatpush1.msra.mxu0 0.0
    %1198 = vmatprep.subr.mxu0 0.0
    %1199 = vmatpush1.msra.mxu0 0.0
    %1200 = vmatprep.subr.mxu0 0.0
    %1201 = vmatpush1.msra.mxu0 0.0
    %1202 = vmatprep.subr.mxu0 0.0
    %1203 = vmatpush1.msra.mxu0 0.0
    %1204 = vmatprep.subr.mxu0 0.0
    %1205 = vmatpush1.msra.mxu0 0.0
    %1206 = vmatprep.subr.mxu0 0.0
    %1207 = vmatpush1.msra.mxu0 0.0
    %1208 = vmatprep.subr.mxu0 0.0
    %1209 = vmatpush1.msra.mxu0 0.0
    %1210 = vmatprep.subr.mxu0 0.0
    %1211 = vmatpush1.msra.mxu0 0.0
    %1212 = vmatprep.subr.mxu0 0.0
    %1213 = vmatpush1.msra.mxu0 0.0
    %1214 = vmatprep.subr.mxu0 0.0
    %1215 = vmatpush1.msra.mxu0 0.0
    %1216 = vmatprep.subr.mxu0 0.0
    %1217 = vmatpush1.msra.mxu0 0.0
    %1218 = vmatprep.subr.mxu0 0.0
    %1219 = vmatpush1.msra.mxu0 0.0
    %1220 = vmatprep.subr.mxu0 0.0
    %1221 = vmatpush1.msra.mxu0 0.0
    %1222 = vmatprep.subr.mxu0 0.0
    %1223 = vmatpush1.msra.mxu0 0.0
    %1224 = vmatprep.subr.mxu0 0.0
    %1225 = vmatpush1.msra.mxu0 0.0
    %1226 = vmatprep.subr.mxu0 0.0
    %1227 = vmatpush1.msra.mxu0 0.0
    %1228 = vmatprep.subr.mxu0 0.0
    %1229 = vmatpush1.msra.mxu0 0.0
    %1230 = vmatprep.subr.mxu0 0.0
    %1231 = vmatpush1.msra.mxu0 0.0
    %1232 = vmatprep.subr.mxu0 0.0
    %1233 = vmatpush1.msra.mxu0 0.0
    %1234 = vmatprep.subr.mxu0 0.0
    %1235 = vmatpush1.msra.mxu0 0.0
    %1236 = vmatprep.subr.mxu0 0.0
    %1237 = vmatpush1.msra.mxu0 0.0
    %1238 = vmatprep.subr.mxu0 0.0
    %1239 = vmatpush1.msra.mxu0 0.0
    %1240 = vmatprep.subr.mxu0 0.0
    %1241 = vmatpush1.msra.mxu0 0.0
    %1242 = vmatprep.mubr.f32.mxu0 0.0
    %1243 = vmatmul.mubr.f32.gmra.mrb[0].mxu0 %v1176
    %v1244 = vpop.f32.mrb[0].mxu0
    %v1245 = vadd.f32 0.0, %v1244
    %v1246 = vpop.f32.mrb[0].mxu0
    %v1247 = vadd.f32 0.0, %v1246
    %1248 = vdwg.mxu0
    %v1250 = vrot.slane %v1245, 4
    %v1252 = vadd.f32 %v288, %v1250
    %v1253 = vxor.u32 %v1252, 2147483648
    %v1254 = vmul.f32 %v1253, 1.442695
    %v1255 = vpow.pop %v1254
    %v1256 = vadd.f32 %v1255, 1.0
    %v1257 = vrcp.pop %v1256
    %v1258 = vmul.f32 1.0, %v1257
    %v1259 = vtanh.pop %v1252
    %v1261 = vrot.slane %v1126, 6
    %v1263 = vmul.f32 %v1258, %v1261
    %1265 = vrot.lane.b32.xlu0 %v1259, 64
    %v1266 = vpop.permute.xlu0 %1265
    %v1268 = vmul.f32 %v1258, %v1266
    %1270 = vrot.lane.b32.xlu0 %v1268, 32
    %v1271 = vpop.permute.xlu0 %1270
    %v1273 = vadd.f32 %v1263, %v1271
    %v1274 = vtanh.pop %v1273
    %1276 = vrot.lane.b32.xlu0 %v1274, 64
    %v1277 = vpop.permute.xlu0 %1276
    %v1279 = vmul.f32 %v1258, %v1277
    %v1281 = vrot.slane %v1247, 6
    %v1283 = vadd.f32 %v284, %v1281
    %v1284 = vxor.u32 %v1283, 2147483648
    %v1285 = vmul.f32 %v1284, 1.442695
    %v1286 = vpow.pop %v1285
    %v1287 = vadd.f32 %v1286, 1.0
    %v1288 = vrcp.pop %v1287
    %v1289 = vmul.f32 1.0, %v1288
    %v1290 = vtanh.pop %v1283
    %v1292 = vrot.slane %v1157, 2
    %v1294 = vmul.f32 %v1289, %v1292
    %1296 = vrot.lane.b32.xlu0 %v1290, 64
    %v1297 = vpop.permute.xlu0 %1296
    %v1299 = vmul.f32 %v1289, %v1297
    %1301 = vrot.lane.b32.xlu0 %v1299, 32
    %v1302 = vpop.permute.xlu0 %1301
    %v1304 = vadd.f32 %v1294, %v1302
    %v1305 = vtanh.pop %v1304
    %1307 = vrot.lane.b32.xlu0 %v1305, 64
    %v1308 = vpop.permute.xlu0 %1307
    %v1310 = vmul.f32 %v1289, %v1308
    %1312 = vrot.lane.b32.xlu0 %v1279, 32
    %v1313 = vpop.permute.xlu0 %1312
    %v1316 = vrot.slane %v1310, 6
    %1317 = vrot.lane.b32.xlu0 %v1316, 64
    %v1318 = vpop.permute.xlu0 %1317
    %v1320 = vsel %vm445, %v1313, %v1318
    %v1322 = vrot.slane %v1320, 4
    %v1323 = vsel %vm308, %v1322, 0
    %1325 = vmatprep.subr.mxu0 %v293
    %1326 = vmatpush1.msra.mxu0 %v292
    %1327 = vmatprep.subr.mxu0 %v295
    %1328 = vmatpush1.msra.mxu0 %v294
    %1329 = vmatprep.subr.mxu0 %v297
    %1330 = vmatpush1.msra.mxu0 %v296
    %1331 = vmatprep.subr.mxu0 %v299
    %1332 = vmatpush1.msra.mxu0 %v298
    %1333 = vmatprep.subr.mxu0 %v301
    %1334 = vmatpush1.msra.mxu0 %v300
    %1335 = vmatprep.subr.mxu0 %v303
    %1336 = vmatpush1.msra.mxu0 %v302
    %1337 = vmatprep.subr.mxu0 %v305
    %1338 = vmatpush1.msra.mxu0 %v304
    %1339 = vmatprep.subr.mxu0 %v307
    %1340 = vmatpush1.msra.mxu0 %v306
    %1341 = vmatprep.subr.mxu0 0.0
    %1342 = vmatpush1.msra.mxu0 0.0
    %1343 = vmatprep.subr.mxu0 0.0
    %1344 = vmatpush1.msra.mxu0 0.0
    %1345 = vmatprep.subr.mxu0 0.0
    %1346 = vmatpush1.msra.mxu0 0.0
    %1347 = vmatprep.subr.mxu0 0.0
    %1348 = vmatpush1.msra.mxu0 0.0
    %1349 = vmatprep.subr.mxu0 0.0
    %1350 = vmatpush1.msra.mxu0 0.0
    %1351 = vmatprep.subr.mxu0 0.0
    %1352 = vmatpush1.msra.mxu0 0.0
    %1353 = vmatprep.subr.mxu0 0.0
    %1354 = vmatpush1.msra.mxu0 0.0
    %1355 = vmatprep.subr.mxu0 0.0
    %1356 = vmatpush1.msra.mxu0 0.0
    %1357 = vmatprep.subr.mxu0 0.0
    %1358 = vmatpush1.msra.mxu0 0.0
    %1359 = vmatprep.subr.mxu0 0.0
    %1360 = vmatpush1.msra.mxu0 0.0
    %1361 = vmatprep.subr.mxu0 0.0
    %1362 = vmatpush1.msra.mxu0 0.0
    %1363 = vmatprep.subr.mxu0 0.0
    %1364 = vmatpush1.msra.mxu0 0.0
    %1365 = vmatprep.subr.mxu0 0.0
    %1366 = vmatpush1.msra.mxu0 0.0
    %1367 = vmatprep.subr.mxu0 0.0
    %1368 = vmatpush1.msra.mxu0 0.0
    %1369 = vmatprep.subr.mxu0 0.0
    %1370 = vmatpush1.msra.mxu0 0.0
    %1371 = vmatprep.subr.mxu0 0.0
    %1372 = vmatpush1.msra.mxu0 0.0
    %1373 = vmatprep.subr.mxu0 0.0
    %1374 = vmatpush1.msra.mxu0 0.0
    %1375 = vmatprep.subr.mxu0 0.0
    %1376 = vmatpush1.msra.mxu0 0.0
    %1377 = vmatprep.subr.mxu0 0.0
    %1378 = vmatpush1.msra.mxu0 0.0
    %1379 = vmatprep.subr.mxu0 0.0
    %1380 = vmatpush1.msra.mxu0 0.0
    %1381 = vmatprep.subr.mxu0 0.0
    %1382 = vmatpush1.msra.mxu0 0.0
    %1383 = vmatprep.subr.mxu0 0.0
    %1384 = vmatpush1.msra.mxu0 0.0
    %1385 = vmatprep.subr.mxu0 0.0
    %1386 = vmatpush1.msra.mxu0 0.0
    %1387 = vmatprep.subr.mxu0 0.0
    %1388 = vmatpush1.msra.mxu0 0.0
    %1389 = vmatprep.mubr.f32.mxu0 0.0
    %1390 = vmatmul.mubr.f32.gmra.mrb[0].mxu0 %v1323
    %v1391 = vpop.f32.mrb[0].mxu0
    %v1392 = vadd.f32 0.0, %v1391
    %v1393 = vpop.f32.mrb[0].mxu0
    %v1394 = vadd.f32 0.0, %v1393
    %1395 = vdwg.mxu0
    %v1397 = vrot.slane %v1392, 2
    %v1399 = vadd.f32 %v288, %v1397
    %v1400 = vxor.u32 %v1399, 2147483648
    %v1401 = vmul.f32 %v1400, 1.442695
    %v1402 = vpow.pop %v1401
    %v1403 = vadd.f32 %v1402, 1.0
    %v1404 = vrcp.pop %v1403
    %v1405 = vmul.f32 1.0, %v1404
    %v1406 = vtanh.pop %v1399
    %v1408 = vrot.slane %v1273, 6
    %v1410 = vmul.f32 %v1405, %v1408
    %1412 = vrot.lane.b32.xlu0 %v1406, 64
    %v1413 = vpop.permute.xlu0 %1412
    %v1415 = vmul.f32 %v1405, %v1413
    %1417 = vrot.lane.b32.xlu0 %v1415, 32
    %v1418 = vpop.permute.xlu0 %1417
    %v1420 = vadd.f32 %v1410, %v1418
    %v1421 = vtanh.pop %v1420
    %1423 = vrot.lane.b32.xlu0 %v1421, 64
    %v1424 = vpop.permute.xlu0 %1423
    %v1426 = vmul.f32 %v1405, %v1424
    %v1427 = vadd.f32 %v284, %v1394
    %v1428 = vxor.u32 %v1427, 2147483648
    %v1429 = vmul.f32 %v1428, 1.442695
    %v1430 = vpow.pop %v1429
    %v1431 = vadd.f32 %v1430, 1.0
    %v1432 = vrcp.pop %v1431
    %v1433 = vmul.f32 1.0, %v1432
    %v1434 = vtanh.pop %v1427
    %v1436 = vrot.slane %v1304, 2
    %v1438 = vmul.f32 %v1433, %v1436
    %1440 = vrot.lane.b32.xlu0 %v1434, 64
    %v1441 = vpop.permute.xlu0 %1440
    %v1443 = vmul.f32 %v1433, %v1441
    %1445 = vrot.lane.b32.xlu0 %v1443, 32
    %v1446 = vpop.permute.xlu0 %1445
    %v1448 = vadd.f32 %v1438, %v1446
    %v1449 = vtanh.pop %v1448
    %1451 = vrot.lane.b32.xlu0 %v1449, 64
    %v1452 = vpop.permute.xlu0 %1451
    %v1454 = vmul.f32 %v1433, %v1452
    %1456 = vrot.lane.b32.xlu0 %v1426, 32
    %v1457 = vpop.permute.xlu0 %1456
    %v1460 = vrot.slane %v1454, 2
    %1461 = vrot.lane.b32.xlu0 %v1460, 64
    %v1462 = vpop.permute.xlu0 %1461
    %v1464 = vsel %vm445, %v1457, %v1462
    %v1465 = vld [vmem:[%s4] sm:$0xff]
    %v1466 = vld [vmem:[%s4 + $0x8] sm:$0xff]
    %v1467 = vld [vmem:[%s4 + $0x10] sm:$0xff]
    %v1468 = vld [vmem:[%s4 + $0x18] sm:$0xff]
    %v1469 = vld [vmem:[%s4 + $0x20] sm:$0xff]
    %v1470 = vld [vmem:[%s4 + $0x28] sm:$0xff]
    %v1471 = vld [vmem:[%s4 + $0x30] sm:$0xff]
    %v1472 = vld [vmem:[%s4 + $0x38] sm:$0xff]
    %v1473 = vld [vmem:[%s5] sm:$0x1]
    %v1475 = vlaneseq
    %v1476 = vshrl.u32 %v1475, 7
    %v1477 = vsub.s32 0, %v1476
    %v1478 = vrot.slane %v1473, %v1477
    %v1481 = vrot.slane %v1464, 6
    %v1482 = vsel %vm308, %v1481, 0
    %1484 = vmatprep.subr.mxu0 0.0
    %1485 = vmatpush1.msra.mxu0 %v1465
    %1486 = vmatprep.subr.mxu0 0.0
    %1487 = vmatpush1.msra.mxu0 %v1466
    %1488 = vmatprep.subr.mxu0 0.0
    %1489 = vmatpush1.msra.mxu0 %v1467
    %1490 = vmatprep.subr.mxu0 0.0
    %1491 = vmatpush1.msra.mxu0 %v1468
    %1492 = vmatprep.subr.mxu0 0.0
    %1493 = vmatpush1.msra.mxu0 %v1469
    %1494 = vmatprep.subr.mxu0 0.0
    %1495 = vmatpush1.msra.mxu0 %v1470
    %1496 = vmatprep.subr.mxu0 0.0
    %1497 = vmatpush1.msra.mxu0 %v1471
    %1498 = vmatprep.subr.mxu0 0.0
    %1499 = vmatpush1.msra.mxu0 %v1472
    %1500 = vmatprep.subr.mxu0 0.0
    %1501 = vmatpush1.msra.mxu0 0.0
    %1502 = vmatprep.subr.mxu0 0.0
    %1503 = vmatpush1.msra.mxu0 0.0
    %1504 = vmatprep.subr.mxu0 0.0
    %1505 = vmatpush1.msra.mxu0 0.0
    %1506 = vmatprep.subr.mxu0 0.0
    %1507 = vmatpush1.msra.mxu0 0.0
    %1508 = vmatprep.subr.mxu0 0.0
    %1509 = vmatpush1.msra.mxu0 0.0
    %1510 = vmatprep.subr.mxu0 0.0
    %1511 = vmatpush1.msra.mxu0 0.0
    %1512 = vmatprep.subr.mxu0 0.0
    %1513 = vmatpush1.msra.mxu0 0.0
    %1514 = vmatprep.subr.mxu0 0.0
    %1515 = vmatpush1.msra.mxu0 0.0
    %1516 = vmatprep.subr.mxu0 0.0
    %1517 = vmatpush1.msra.mxu0 0.0
    %1518 = vmatprep.subr.mxu0 0.0
    %1519 = vmatpush1.msra.mxu0 0.0
    %1520 = vmatprep.subr.mxu0 0.0
    %1521 = vmatpush1.msra.mxu0 0.0
    %1522 = vmatprep.subr.mxu0 0.0
    %1523 = vmatpush1.msra.mxu0 0.0
    %1524 = vmatprep.subr.mxu0 0.0
    %1525 = vmatpush1.msra.mxu0 0.0
    %1526 = vmatprep.subr.mxu0 0.0
    %1527 = vmatpush1.msra.mxu0 0.0
    %1528 = vmatprep.subr.mxu0 0.0
    %1529 = vmatpush1.msra.mxu0 0.0
    %1530 = vmatprep.subr.mxu0 0.0
    %1531 = vmatpush1.msra.mxu0 0.0
    %1532 = vmatprep.subr.mxu0 0.0
    %1533 = vmatpush1.msra.mxu0 0.0
    %1534 = vmatprep.subr.mxu0 0.0
    %1535 = vmatpush1.msra.mxu0 0.0
    %1536 = vmatprep.subr.mxu0 0.0
    %1537 = vmatpush1.msra.mxu0 0.0
    %1538 = vmatprep.subr.mxu0 0.0
    %1539 = vmatpush1.msra.mxu0 0.0
    %1540 = vmatprep.subr.mxu0 0.0
    %1541 = vmatpush1.msra.mxu0 0.0
    %1542 = vmatprep.subr.mxu0 0.0
    %1543 = vmatpush1.msra.mxu0 0.0
    %1544 = vmatprep.subr.mxu0 0.0
    %1545 = vmatpush1.msra.mxu0 0.0
    %1546 = vmatprep.subr.mxu0 0.0
    %1547 = vmatpush1.msra.mxu0 0.0
    %1548 = vmatprep.mubr.f32.mxu0 0.0
    %1549 = vmatmul.mubr.f32.gmra.mrb[0].mxu0 %v1482
    %v1550 = vpop.f32.mrb[0].mxu0
    %v1551 = vadd.f32 %v1478, %v1550
    %v1552 = vpop.f32.mrb[0].mxu0
    %1553 = vdwg.mxu0
    %v1554 = vmax.f32 %v1551, 0.0
    %v1555 = vld [vmem:[%s6] sm:$0xff]
    %v1556 = vld [vmem:[%s6 + $0x8] sm:$0xff]
    %v1557 = vld [vmem:[%s6 + $0x10] sm:$0xff]
    %v1558 = vld [vmem:[%s6 + $0x18] sm:$0xff]
    %v1559 = vld [vmem:[%s6 + $0x20] sm:$0xff]
    %v1560 = vld [vmem:[%s6 + $0x28] sm:$0xff]
    %v1561 = vld [vmem:[%s6 + $0x30] sm:$0xff]
    %v1562 = vld [vmem:[%s6 + $0x38] sm:$0xff]
    %v1563 = vld [vmem:[%s7] sm:$0x1]
    %v1565 = vlaneseq
    %v1566 = vshrl.u32 %v1565, 7
    %v1567 = vsub.s32 0, %v1566
    %v1568 = vrot.slane %v1563, %v1567
    %v1571 = vsel %vm308, %v1554, 0
    %1573 = vmatprep.subr.mxu0 0.0
    %1574 = vmatpush1.msra.mxu0 %v1555
    %1575 = vmatprep.subr.mxu0 0.0
    %1576 = vmatpush1.msra.mxu0 %v1556
    %1577 = vmatprep.subr.mxu0 0.0
    %1578 = vmatpush1.msra.mxu0 %v1557
    %1579 = vmatprep.subr.mxu0 0.0
    %1580 = vmatpush1.msra.mxu0 %v1558
    %1581 = vmatprep.subr.mxu0 0.0
    %1582 = vmatpush1.msra.mxu0 %v1559
    %1583 = vmatprep.subr.mxu0 0.0
    %1584 = vmatpush1.msra.mxu0 %v1560
    %1585 = vmatprep.subr.mxu0 0.0
    %1586 = vmatpush1.msra.mxu0 %v1561
    %1587 = vmatprep.subr.mxu0 0.0
    %1588 = vmatpush1.msra.mxu0 %v1562
    %1589 = vmatprep.subr.mxu0 0.0
    %1590 = vmatpush1.msra.mxu0 0.0
    %1591 = vmatprep.subr.mxu0 0.0
    %1592 = vmatpush1.msra.mxu0 0.0
    %1593 = vmatprep.subr.mxu0 0.0
    %1594 = vmatpush1.msra.mxu0 0.0
    %1595 = vmatprep.subr.mxu0 0.0
    %1596 = vmatpush1.msra.mxu0 0.0
    %1597 = vmatprep.subr.mxu0 0.0
    %1598 = vmatpush1.msra.mxu0 0.0
    %1599 = vmatprep.subr.mxu0 0.0
    %1600 = vmatpush1.msra.mxu0 0.0
    %1601 = vmatprep.subr.mxu0 0.0
    %1602 = vmatpush1.msra.mxu0 0.0
    %1603 = vmatprep.subr.mxu0 0.0
    %1604 = vmatpush1.msra.mxu0 0.0
    %1605 = vmatprep.subr.mxu0 0.0
    %1606 = vmatpush1.msra.mxu0 0.0
    %1607 = vmatprep.subr.mxu0 0.0
    %1608 = vmatpush1.msra.mxu0 0.0
    %1609 = vmatprep.subr.mxu0 0.0
    %1610 = vmatpush1.msra.mxu0 0.0
    %1611 = vmatprep.subr.mxu0 0.0
    %1612 = vmatpush1.msra.mxu0 0.0
    %1613 = vmatprep.subr.mxu0 0.0
    %1614 = vmatpush1.msra.mxu0 0.0
    %1615 = vmatprep.subr.mxu0 0.0
    %1616 = vmatpush1.msra.mxu0 0.0
    %1617 = vmatprep.subr.mxu0 0.0
    %1618 = vmatpush1.msra.mxu0 0.0
    %1619 = vmatprep.subr.mxu0 0.0
    %1620 = vmatpush1.msra.mxu0 0.0
    %1621 = vmatprep.subr.mxu0 0.0
    %1622 = vmatpush1.msra.mxu0 0.0
    %1623 = vmatprep.subr.mxu0 0.0
    %1624 = vmatpush1.msra.mxu0 0.0
    %1625 = vmatprep.subr.mxu0 0.0
    %1626 = vmatpush1.msra.mxu0 0.0
    %1627 = vmatprep.subr.mxu0 0.0
    %1628 = vmatpush1.msra.mxu0 0.0
    %1629 = vmatprep.subr.mxu0 0.0
    %1630 = vmatpush1.msra.mxu0 0.0
    %1631 = vmatprep.subr.mxu0 0.0
    %1632 = vmatpush1.msra.mxu0 0.0
    %1633 = vmatprep.subr.mxu0 0.0
    %1634 = vmatpush1.msra.mxu0 0.0
    %1635 = vmatprep.subr.mxu0 0.0
    %1636 = vmatpush1.msra.mxu0 0.0
    %1637 = vmatprep.mubr.f32.mxu0 0.0
    %1638 = vmatmul.mubr.f32.gmra.mrb[0].mxu0 %v1571
    %v1639 = vpop.f32.mrb[0].mxu0
    %v1640 = vadd.f32 %v1568, %v1639
    %v1641 = vpop.f32.mrb[0].mxu0
    %1642 = vdwg.mxu0
    %vm1643 = vcmask 17408
    %1644 = vst.msk [vmem:[#allocation2] sm:$0x3] %vm1643, %v1640
    // Predicated region
    $region34: #{lstm_classifier_forward.1} parent=1 // pred_check
      _
    $region35: #{lstm_classifier_forward.1} parent=1 // pred_check_branch
      %1646 = sbr.rel (0) target = $region37
    $region36: #{lstm_classifier_forward.1} parent=1 // pred_region
      %s1648 = ssub.s32 32, 32
      %1649 = vsyncadd [#allocation3], %s1648
      %s1651 = sshll.u32 [#allocation2], 4
      %s1652 = int_to_ptr.vmem [resolvable:$true] %s1651
      %1654 = dma.vmem_to_hbm [thread:$0]  %s1652, 32, %s8, [#allocation3]
    $region37: #{lstm_classifier_forward.1} parent=1 // pred_fallthru
      _
    // Predicated region
    $region38: #{lstm_classifier_forward.1} parent=1 // pred_check
      _
    $region39: #{lstm_classifier_forward.1} parent=1 // pred_check_branch
      %1656 = sbr.rel (0) target = $region41
    $region40: #{lstm_classifier_forward.1} parent=1 // pred_region
      %1657 = dma.done [#allocation3], 32
    $region41: #{lstm_classifier_forward.1} parent=1 // pred_fallthru
      _
    %1658 = vsyncpa [#allocation3], 1

</llo_original>
